<compile_context>
chip_gen: v5e
topology: v5e:2x2
jax: 0.10.0
libtpu: 0.0.40
codegen_flags: <defaults>
</compile_context>

<pallas_src>
import functools

import jax
import jax.numpy as jnp
from jax.experimental import pallas as pl
from jax.experimental.pallas import tpu as pltpu

BN_EPS = 1e-5


def _depthwise_block_kernel(xw_ref, dw_ref, dwb_ref, pw_ref, pwb_ref, out_ref,
                            *, TH, Wo, Cin, Cout_p, stride):
    """One (batch, row-tile) grid step.

    xw_ref  : (TH*stride + 2, Wp, Cin) bf16  padded input window (incl. halo)
    dw_ref  : (9, Cin)                 bf16  depthwise weights (BN scale folded)
    dwb_ref : (1, Cin)                 f32   depthwise BN shift
    pw_ref  : (Cin, Cout_p)            bf16  pointwise weights (BN scale folded)
    pwb_ref : (1, Cout_p)              f32   pointwise BN shift
    out_ref : (TH, Wo, Cout_p)         bf16
    """
    THs = TH * stride
    # bf16 taps on the stride-1 hot path (v6e/v7x bf16 VPU, half the vreg
    # traffic); f32 window math on the (rare) strided layers.
    cdt = jnp.bfloat16 if stride == 1 else jnp.float32
    xw = xw_ref[...].astype(cdt)               # (THs+2, Wp, Cin)
    dw = dw_ref[...].astype(cdt)               # (9, Cin)

    # Pre-shift the 3 kw (width / sublane-axis) offsets once; the kh offsets
    # below only index the leading row dim, which is relayout-free.
    w_lim = (Wo - 1) * stride + 1
    cols = [
        jax.lax.slice(xw, (0, kw, 0), (THs + 2, kw + w_lim, Cin),
                      (1, stride, 1))
        for kw in range(3)
    ]                                          # each (THs+2, Wo, Cin)

    # 9-tap depthwise MAC: narrow multiplies, f32 accumulation.
    h_lim = (TH - 1) * stride + 1
    acc = jnp.zeros((TH, Wo, Cin), jnp.float32)
    for kh in range(3):
        for kw in range(3):
            rows = jax.lax.slice(cols[kw], (kh, 0, 0),
                                 (kh + h_lim, Wo, Cin), (stride, 1, 1))
            acc = acc + rows * dw[kh * 3 + kw]

    # Depthwise BN shift (scale already folded into dw) + ReLU.
    acc = jnp.maximum(acc + dwb_ref[...].reshape(1, 1, Cin), 0.0)

    # Pointwise 1x1 conv == (TH*Wo, Cin) @ (Cin, Cout_p) on the MXU: bf16
    # operands, f32 accumulation.  (Wo is a multiple of 8 for typical layers,
    # so the reshape is layout-free.)
    mid = acc.astype(jnp.bfloat16).reshape(TH * Wo, Cin)
    y = jnp.dot(mid, pw_ref[...], preferred_element_type=jnp.float32)
    y = jnp.maximum(y + pwb_ref[...], 0.0)

    out_ref[...] = y.reshape(TH, Wo, Cout_p).astype(out_ref.dtype)


def _vmem_budgets():
    """(tile-picking budget, compiler vmem_limit_bytes), generation-aware."""
    try:
        cap = pltpu.get_tpu_info().vmem_capacity_bytes
    except Exception:
        cap = 64 * 1024 * 1024                    # assume the small (v7x) part
    if cap >= 128 * 1024 * 1024:                  # v5e / v6e class
        return 28 * 1024 * 1024, 64 * 1024 * 1024
    return 14 * 1024 * 1024, 36 * 1024 * 1024     # v7x class


def _pick_row_tile(Ho, Wo, Wp, Cin, Cout_p, stride, budget):
    """Largest output-row tile (divisor of Ho) whose per-step working set fits
    the budget; bigger tiles win for this memory-bound kernel.  For CIFAR-size
    layers this is the whole image (grid = batch only)."""
    def est(th):
        ths = th * stride
        win = (ths + 2) * Wp * Cin * 2                 # bf16 window
        outb = th * Wo * Cout_p * 2                    # bf16 output tile
        wts = Cin * Cout_p * 2 + 12 * Cin + 4 * Cout_p
        shifted = 3 * (ths + 2) * Wo * Cin * 4         # kw-shifted copies
        accb = th * Wo * Cin * 4                       # f32 depthwise acc
        mm = th * Wo * (Cin * 2 + Cout_p * 4)          # matmul temporaries
        return 2 * (win + outb + wts) + shifted + accb + mm
    divisors = [d for d in range(1, Ho + 1) if Ho % d == 0]
    fits = [d for d in divisors if est(d) <= budget]
    return max(fits) if fits else 1


def depthwise_block(x_nchw, params, stride=1):
    """Forward pass of the Depthwise module (eval-mode BN).  NCHW f32 in/out.

    NOTE: when chaining blocks, keep activations bf16 NHWC between calls to
    avoid the NCHW<->NHWC transposes done here only for PyTorch layout parity.
    """
    (dw_w, dw_g, dw_b, dw_m, dw_v,
     pw_w, pw_g, pw_b, pw_m, pw_v) = params

    B, Cin, H, W = x_nchw.shape
    Cout = pw_w.shape[0]
    Ho = (H + 2 - 3) // stride + 1
    Wo = (W + 2 - 3) // stride + 1
    # Lane-dense 128-padding only pays off for large Cout; for small Cout it
    # would inflate HBM writeback (16x for Cout=8) and need an extra slice pass.
    Cout_p = Cout if Cout < 128 else ((Cout + 127) // 128) * 128

    # Fold BatchNorm (eval mode): scale into the conv weights, keep shift-add.
    dw_scale = dw_g * jax.lax.rsqrt(dw_v + BN_EPS)                    # (Cin,)
    dw_shift = (dw_b - dw_m * dw_scale).reshape(1, Cin)               # f32
    pw_scale = pw_g * jax.lax.rsqrt(pw_v + BN_EPS)                    # (Cout,)
    pw_shift = pw_b - pw_m * pw_scale

    dw_flat = (jnp.transpose(dw_w[:, 0, :, :], (1, 2, 0))             # (3,3,Cin)
               * dw_scale.reshape(1, 1, Cin)
               ).reshape(9, Cin).astype(jnp.bfloat16)
    pw_cin_cout = (jnp.transpose(pw_w[:, :, 0, 0], (1, 0))
                   * pw_scale.reshape(1, Cout))                       # (Cin,Cout)
    pw_cin_cout = jnp.pad(pw_cin_cout,
                          ((0, 0), (0, Cout_p - Cout))).astype(jnp.bfloat16)
    pw_shift_p = jnp.pad(pw_shift, (0, Cout_p - Cout)).reshape(1, Cout_p)

    # NCHW -> NHWC, bf16 in HBM (halves DMA bytes), pad spatially so every row
    # window (incl. its 2-row halo) is in-bounds.
    # TODO(synk): when chaining blocks, keep bf16 NHWC (and emit the padded
    # halo windows) in the producer to drop this extra HBM pass.
    x = jnp.transpose(x_nchw, (0, 2, 3, 1)).astype(jnp.bfloat16)
    pad_b = Ho * stride + 1 - H
    pad_r = (Wo - 1) * stride + 2 - W
    xp = jnp.pad(x, ((0, 0), (1, pad_b), (1, pad_r), (0, 0)))
    Wp = W + 1 + pad_r

    budget, vmem_limit = _vmem_budgets()
    TH = _pick_row_tile(Ho, Wo, Wp, Cin, Cout_p, stride, budget)
    nT = Ho // TH
    THs = TH * stride

    # One overlapping input window per (batch, row-tile) grid step.  In the
    # common nT == 1 case this is exactly the padded image (no duplication);
    # otherwise the (THs+2)-row windows are built in the same fused XLA pass
    # as the transpose/pad above.
    if nT == 1:
        xw = xp                                            # (B, THs+2, Wp, Cin)
    else:
        xw = jnp.stack(
            [xp[:, t * THs: t * THs + THs + 2] for t in range(nT)], axis=1
        ).reshape(B * nT, THs + 2, Wp, Cin)

    kernel = functools.partial(_depthwise_block_kernel, TH=TH, Wo=Wo,
                               Cin=Cin, Cout_p=Cout_p, stride=stride)

    out_nhwc = pl.pallas_call(
        kernel,
        out_shape=jax.ShapeDtypeStruct((B, Ho, Wo, Cout_p), jnp.bfloat16),
        grid_spec=pltpu.PrefetchScalarGridSpec(
            num_scalar_prefetch=0,
            grid=(B, nT),
            in_specs=[
                # full (THs+2)-row window for this tile, single DMA per step
                pl.BlockSpec((pl.Squeezed(), THs + 2, Wp, Cin),
                             lambda b, t: (b * nT + t, 0, 0, 0)),
                pl.BlockSpec((9, Cin), lambda b, t: (0, 0)),
                pl.BlockSpec((1, Cin), lambda b, t: (0, 0)),
                pl.BlockSpec((Cin, Cout_p), lambda b, t: (0, 0)),
                pl.BlockSpec((1, Cout_p), lambda b, t: (0, 0)),
            ],
            out_specs=pl.BlockSpec((pl.Squeezed(), TH, Wo, Cout_p),
                                   lambda b, t: (b, t, 0, 0)),
        ),
        compiler_params=pltpu.CompilerParams(
            dimension_semantics=("parallel", "parallel"),
            vmem_limit_bytes=vmem_limit),
    )(xw, dw_flat, dw_shift, pw_cin_cout, pw_shift_p)

    out = out_nhwc if Cout_p == Cout else out_nhwc[..., :Cout]
    return jnp.transpose(out, (0, 3, 1, 2)).astype(jnp.float32)


def depthwise_block_ref(x_nchw, params, stride=1):
    """Pure f32 reference of the PyTorch module (eval-mode BN)."""
    (dw_w, dw_g, dw_b, dw_m, dw_v,
     pw_w, pw_g, pw_b, pw_m, pw_v) = params
    Cin = x_nchw.shape[1]

    y = jax.lax.conv_general_dilated(
        x_nchw, dw_w, window_strides=(stride, stride),
        padding=((1, 1), (1, 1)), feature_group_count=Cin,
        dimension_numbers=("NCHW", "OIHW", "NCHW"),
        precision=jax.lax.Precision.HIGHEST)
    y = (y - dw_m[None, :, None, None]) * jax.lax.rsqrt(dw_v + BN_EPS)[None, :, None, None]
    y = y * dw_g[None, :, None, None] + dw_b[None, :, None, None]
    y = jnp.maximum(y, 0.0)

    y = jax.lax.conv_general_dilated(
        y, pw_w, window_strides=(1, 1), padding=((0, 0), (0, 0)),
        dimension_numbers=("NCHW", "OIHW", "NCHW"),
        precision=jax.lax.Precision.HIGHEST)
    y = (y - pw_m[None, :, None, None]) * jax.lax.rsqrt(pw_v + BN_EPS)[None, :, None, None]
    y = y * pw_g[None, :, None, None] + pw_b[None, :, None, None]
    return jnp.maximum(y, 0.0)


def make_params(key, in_channels, out_channels):
    ks = jax.random.split(key, 10)
    dw_w = jax.random.normal(ks[0], (in_channels, 1, 3, 3), jnp.float32) * 0.2
    dw_g = jax.random.uniform(ks[1], (in_channels,), jnp.float32, 0.5, 1.5)
    dw_b = jax.random.normal(ks[2], (in_channels,), jnp.float32) * 0.1
    dw_m = jax.random.normal(ks[3], (in_channels,), jnp.float32) * 0.1
    dw_v = jax.random.uniform(ks[4], (in_channels,), jnp.float32, 0.5, 1.5)
    pw_w = jax.random.normal(ks[5], (out_channels, in_channels, 1, 1), jnp.float32) * 0.2
    pw_g = jax.random.uniform(ks[6], (out_channels,), jnp.float32, 0.5, 1.5)
    pw_b = jax.random.normal(ks[7], (out_channels,), jnp.float32) * 0.1
    pw_m = jax.random.normal(ks[8], (out_channels,), jnp.float32) * 0.1
    pw_v = jax.random.uniform(ks[9], (out_channels,), jnp.float32, 0.5, 1.5)
    return (dw_w, dw_g, dw_b, dw_m, dw_v, pw_w, pw_g, pw_b, pw_m, pw_v)


if __name__ == "__main__":
    key = jax.random.PRNGKey(0)
    k1, k2, k3, k4 = jax.random.split(key, 4)

    # bf16 activations/weights, bf16 output storage and a bf16-operand MXU
    # matmul => compare against the f32 reference at bf16-level tolerance.
    TOL = 3e-2

    # Stride-1 block (the common MobileNet case).
    B, Cin, H, W, Cout = 2, 4, 16, 16, 8
    x = jax.random.normal(k1, (B, Cin, H, W), jnp.float32)
    params = make_params(k2, Cin, Cout)
    out = jax.block_until_ready(depthwise_block(x, params, stride=1))
    ref = depthwise_block_ref(x, params, stride=1)
    assert out.shape == ref.shape, (out.shape, ref.shape)
    err = float(jnp.max(jnp.abs(out - ref)))
    assert jnp.allclose(out, ref, rtol=TOL, atol=TOL), err

    # Stride-2 block (MobileNet downsampling path).
    B2, Cin2, H2, W2, Cout2 = 2, 8, 16, 16, 16
    x2 = jax.random.normal(k3, (B2, Cin2, H2, W2), jnp.float32)
    params2 = make_params(k4, Cin2, Cout2)
    out2 = jax.block_until_ready(depthwise_block(x2, params2, stride=2))
    ref2 = depthwise_block_ref(x2, params2, stride=2)
    assert out2.shape == ref2.shape, (out2.shape, ref2.shape)
    err2 = float(jnp.max(jnp.abs(out2 - ref2)))
    assert jnp.allclose(out2, ref2, rtol=TOL, atol=TOL), err2

    print("KERNEL_OK")
</pallas_src>

<mosaic_0001>
module attributes {stable_mosaic.version = 11 : i64} {
  func.func @_depthwise_block_kernel(%arg0: i32, %arg1: i32, %arg2: memref<1x18x18x4xbf16, #tpu.memory_space<vmem>>, %arg3: memref<9x4xbf16, #tpu.memory_space<vmem>>, %arg4: memref<1x4xf32, #tpu.memory_space<vmem>>, %arg5: memref<4x8xbf16, #tpu.memory_space<vmem>>, %arg6: memref<1x8xf32, #tpu.memory_space<vmem>>, %arg7: memref<1x16x16x8xbf16, #tpu.memory_space<vmem>>) attributes {dimension_semantics = [#tpu.dimension_semantics<parallel>, #tpu.dimension_semantics<parallel>], iteration_bounds = array<i64: 2, 1>, scalar_prefetch = 0 : i64, scratch_operands = 0 : i64, tpu.core_type = #tpu.core_type<tc>, window_params = [{transform_indices = @transform_0, window_bounds = array<i64: 1, 18, 18, 4>}, {pipeline_mode = #tpu.pipeline_mode<synchronous>, transform_indices = @transform_1, window_bounds = array<i64: 9, 4>}, {pipeline_mode = #tpu.pipeline_mode<synchronous>, transform_indices = @transform_2, window_bounds = array<i64: 1, 4>}, {pipeline_mode = #tpu.pipeline_mode<synchronous>, transform_indices = @transform_3, window_bounds = array<i64: 4, 8>}, {pipeline_mode = #tpu.pipeline_mode<synchronous>, transform_indices = @transform_4, window_bounds = array<i64: 1, 8>}, {transform_indices = @transform_5, window_bounds = array<i64: 1, 16, 16, 8>}]} {
    %c0 = arith.constant 0 : index
    %c0_0 = arith.constant 0 : index
    %c0_1 = arith.constant 0 : index
    %c0_2 = arith.constant 0 : index
    %0 = vector.load %arg2[%c0, %c0_0, %c0_1, %c0_2] : memref<1x18x18x4xbf16, #tpu.memory_space<vmem>>, vector<1x18x18x4xbf16>
    %1 = vector.shape_cast %0 : vector<1x18x18x4xbf16> to vector<18x18x4xbf16>
    %c0_3 = arith.constant 0 : index
    %c0_4 = arith.constant 0 : index
    %2 = vector.load %arg3[%c0_3, %c0_4] : memref<9x4xbf16, #tpu.memory_space<vmem>>, vector<9x4xbf16>
    %3 = vector.extract_strided_slice %1 {offsets = [0, 0, 0], sizes = [18, 16, 4], strides = [1, 1, 1]} : vector<18x18x4xbf16> to vector<18x16x4xbf16>
    %4 = vector.extract_strided_slice %1 {offsets = [0, 1, 0], sizes = [18, 16, 4], strides = [1, 1, 1]} : vector<18x18x4xbf16> to vector<18x16x4xbf16>
    %5 = vector.extract_strided_slice %1 {offsets = [0, 2, 0], sizes = [18, 16, 4], strides = [1, 1, 1]} : vector<18x18x4xbf16> to vector<18x16x4xbf16>
    %cst = arith.constant 0.000000e+00 : f32
    %6 = vector.broadcast %cst : f32 to vector<16x16x4xf32>
    %7 = vector.extract_strided_slice %3 {offsets = [0, 0, 0], sizes = [16, 16, 4], strides = [1, 1, 1]} : vector<18x16x4xbf16> to vector<16x16x4xbf16>
    %8 = vector.extract_strided_slice %2 {offsets = [0, 0], sizes = [1, 4], strides = [1, 1]} : vector<9x4xbf16> to vector<1x4xbf16>
    %9 = vector.shape_cast %8 : vector<1x4xbf16> to vector<4xbf16>
    %10 = vector.shape_cast %9 : vector<4xbf16> to vector<1x1x4xbf16>
    %11 = vector.broadcast %10 : vector<1x1x4xbf16> to vector<16x16x4xbf16>
    %12 = arith.mulf %7, %11 : vector<16x16x4xbf16>
    %13 = arith.extf %12 : vector<16x16x4xbf16> to vector<16x16x4xf32>
    %14 = arith.addf %6, %13 : vector<16x16x4xf32>
    %15 = vector.extract_strided_slice %4 {offsets = [0, 0, 0], sizes = [16, 16, 4], strides = [1, 1, 1]} : vector<18x16x4xbf16> to vector<16x16x4xbf16>
    %16 = vector.extract_strided_slice %2 {offsets = [1, 0], sizes = [1, 4], strides = [1, 1]} : vector<9x4xbf16> to vector<1x4xbf16>
    %17 = vector.shape_cast %16 : vector<1x4xbf16> to vector<4xbf16>
    %18 = vector.shape_cast %17 : vector<4xbf16> to vector<1x1x4xbf16>
    %19 = vector.broadcast %18 : vector<1x1x4xbf16> to vector<16x16x4xbf16>
    %20 = arith.mulf %15, %19 : vector<16x16x4xbf16>
    %21 = arith.extf %20 : vector<16x16x4xbf16> to vector<16x16x4xf32>
    %22 = arith.addf %14, %21 : vector<16x16x4xf32>
    %23 = vector.extract_strided_slice %5 {offsets = [0, 0, 0], sizes = [16, 16, 4], strides = [1, 1, 1]} : vector<18x16x4xbf16> to vector<16x16x4xbf16>
    %24 = vector.extract_strided_slice %2 {offsets = [2, 0], sizes = [1, 4], strides = [1, 1]} : vector<9x4xbf16> to vector<1x4xbf16>
    %25 = vector.shape_cast %24 : vector<1x4xbf16> to vector<4xbf16>
    %26 = vector.shape_cast %25 : vector<4xbf16> to vector<1x1x4xbf16>
    %27 = vector.broadcast %26 : vector<1x1x4xbf16> to vector<16x16x4xbf16>
    %28 = arith.mulf %23, %27 : vector<16x16x4xbf16>
    %29 = arith.extf %28 : vector<16x16x4xbf16> to vector<16x16x4xf32>
    %30 = arith.addf %22, %29 : vector<16x16x4xf32>
    %31 = vector.extract_strided_slice %3 {offsets = [1, 0, 0], sizes = [16, 16, 4], strides = [1, 1, 1]} : vector<18x16x4xbf16> to vector<16x16x4xbf16>
    %32 = vector.extract_strided_slice %2 {offsets = [3, 0], sizes = [1, 4], strides = [1, 1]} : vector<9x4xbf16> to vector<1x4xbf16>
    %33 = vector.shape_cast %32 : vector<1x4xbf16> to vector<4xbf16>
    %34 = vector.shape_cast %33 : vector<4xbf16> to vector<1x1x4xbf16>
    %35 = vector.broadcast %34 : vector<1x1x4xbf16> to vector<16x16x4xbf16>
    %36 = arith.mulf %31, %35 : vector<16x16x4xbf16>
    %37 = arith.extf %36 : vector<16x16x4xbf16> to vector<16x16x4xf32>
    %38 = arith.addf %30, %37 : vector<16x16x4xf32>
    %39 = vector.extract_strided_slice %4 {offsets = [1, 0, 0], sizes = [16, 16, 4], strides = [1, 1, 1]} : vector<18x16x4xbf16> to vector<16x16x4xbf16>
    %40 = vector.extract_strided_slice %2 {offsets = [4, 0], sizes = [1, 4], strides = [1, 1]} : vector<9x4xbf16> to vector<1x4xbf16>
    %41 = vector.shape_cast %40 : vector<1x4xbf16> to vector<4xbf16>
    %42 = vector.shape_cast %41 : vector<4xbf16> to vector<1x1x4xbf16>
    %43 = vector.broadcast %42 : vector<1x1x4xbf16> to vector<16x16x4xbf16>
    %44 = arith.mulf %39, %43 : vector<16x16x4xbf16>
    %45 = arith.extf %44 : vector<16x16x4xbf16> to vector<16x16x4xf32>
    %46 = arith.addf %38, %45 : vector<16x16x4xf32>
    %47 = vector.extract_strided_slice %5 {offsets = [1, 0, 0], sizes = [16, 16, 4], strides = [1, 1, 1]} : vector<18x16x4xbf16> to vector<16x16x4xbf16>
    %48 = vector.extract_strided_slice %2 {offsets = [5, 0], sizes = [1, 4], strides = [1, 1]} : vector<9x4xbf16> to vector<1x4xbf16>
    %49 = vector.shape_cast %48 : vector<1x4xbf16> to vector<4xbf16>
    %50 = vector.shape_cast %49 : vector<4xbf16> to vector<1x1x4xbf16>
    %51 = vector.broadcast %50 : vector<1x1x4xbf16> to vector<16x16x4xbf16>
    %52 = arith.mulf %47, %51 : vector<16x16x4xbf16>
    %53 = arith.extf %52 : vector<16x16x4xbf16> to vector<16x16x4xf32>
    %54 = arith.addf %46, %53 : vector<16x16x4xf32>
    %55 = vector.extract_strided_slice %3 {offsets = [2, 0, 0], sizes = [16, 16, 4], strides = [1, 1, 1]} : vector<18x16x4xbf16> to vector<16x16x4xbf16>
    %56 = vector.extract_strided_slice %2 {offsets = [6, 0], sizes = [1, 4], strides = [1, 1]} : vector<9x4xbf16> to vector<1x4xbf16>
    %57 = vector.shape_cast %56 : vector<1x4xbf16> to vector<4xbf16>
    %58 = vector.shape_cast %57 : vector<4xbf16> to vector<1x1x4xbf16>
    %59 = vector.broadcast %58 : vector<1x1x4xbf16> to vector<16x16x4xbf16>
    %60 = arith.mulf %55, %59 : vector<16x16x4xbf16>
    %61 = arith.extf %60 : vector<16x16x4xbf16> to vector<16x16x4xf32>
    %62 = arith.addf %54, %61 : vector<16x16x4xf32>
    %63 = vector.extract_strided_slice %4 {offsets = [2, 0, 0], sizes = [16, 16, 4], strides = [1, 1, 1]} : vector<18x16x4xbf16> to vector<16x16x4xbf16>
    %64 = vector.extract_strided_slice %2 {offsets = [7, 0], sizes = [1, 4], strides = [1, 1]} : vector<9x4xbf16> to vector<1x4xbf16>
    %65 = vector.shape_cast %64 : vector<1x4xbf16> to vector<4xbf16>
    %66 = vector.shape_cast %65 : vector<4xbf16> to vector<1x1x4xbf16>
    %67 = vector.broadcast %66 : vector<1x1x4xbf16> to vector<16x16x4xbf16>
    %68 = arith.mulf %63, %67 : vector<16x16x4xbf16>
    %69 = arith.extf %68 : vector<16x16x4xbf16> to vector<16x16x4xf32>
    %70 = arith.addf %62, %69 : vector<16x16x4xf32>
    %71 = vector.extract_strided_slice %5 {offsets = [2, 0, 0], sizes = [16, 16, 4], strides = [1, 1, 1]} : vector<18x16x4xbf16> to vector<16x16x4xbf16>
    %72 = vector.extract_strided_slice %2 {offsets = [8, 0], sizes = [1, 4], strides = [1, 1]} : vector<9x4xbf16> to vector<1x4xbf16>
    %73 = vector.shape_cast %72 : vector<1x4xbf16> to vector<4xbf16>
    %74 = vector.shape_cast %73 : vector<4xbf16> to vector<1x1x4xbf16>
    %75 = vector.broadcast %74 : vector<1x1x4xbf16> to vector<16x16x4xbf16>
    %76 = arith.mulf %71, %75 : vector<16x16x4xbf16>
    %77 = arith.extf %76 : vector<16x16x4xbf16> to vector<16x16x4xf32>
    %78 = arith.addf %70, %77 : vector<16x16x4xf32>
    %c0_5 = arith.constant 0 : index
    %c0_6 = arith.constant 0 : index
    %79 = vector.load %arg4[%c0_5, %c0_6] : memref<1x4xf32, #tpu.memory_space<vmem>>, vector<1x4xf32>
    %80 = vector.shape_cast %79 : vector<1x4xf32> to vector<1x1x4xf32>
    %81 = vector.broadcast %80 : vector<1x1x4xf32> to vector<16x16x4xf32>
    %82 = arith.addf %78, %81 : vector<16x16x4xf32>
    %cst_7 = arith.constant 0.000000e+00 : f32
    %83 = vector.broadcast %cst_7 : f32 to vector<16x16x4xf32>
    %84 = arith.maximumf %82, %83 : vector<16x16x4xf32>
    %85 = arith.truncf %84 : vector<16x16x4xf32> to vector<16x16x4xbf16>
    %86 = vector.shape_cast %85 : vector<16x16x4xbf16> to vector<256x4xbf16>
    %c0_8 = arith.constant 0 : index
    %c0_9 = arith.constant 0 : index
    %87 = vector.load %arg5[%c0_8, %c0_9] : memref<4x8xbf16, #tpu.memory_space<vmem>>, vector<4x8xbf16>
    %cst_10 = arith.constant dense<0.000000e+00> : vector<256x8xf32>
    %88 = tpu.matmul %86, %87, %cst_10 {dimension_numbers = #tpu.dot_dimension_numbers<[1], [0], [0], [1], [0, 0, 1, 1], [], []>} : vector<256x4xbf16>, vector<4x8xbf16>, vector<256x8xf32> -> vector<256x8xf32>
    %c0_11 = arith.constant 0 : index
    %c0_12 = arith.constant 0 : index
    %89 = vector.load %arg6[%c0_11, %c0_12] : memref<1x8xf32, #tpu.memory_space<vmem>>, vector<1x8xf32>
    %90 = vector.broadcast %89 : vector<1x8xf32> to vector<256x8xf32>
    %91 = arith.addf %88, %90 : vector<256x8xf32>
    %cst_13 = arith.constant 0.000000e+00 : f32
    %92 = vector.broadcast %cst_13 : f32 to vector<256x8xf32>
    %93 = arith.maximumf %91, %92 : vector<256x8xf32>
    %94 = vector.shape_cast %93 : vector<256x8xf32> to vector<16x16x8xf32>
    %95 = arith.truncf %94 : vector<16x16x8xf32> to vector<16x16x8xbf16>
    %c0_14 = arith.constant 0 : index
    %c0_15 = arith.constant 0 : index
    %c0_16 = arith.constant 0 : index
    %c0_17 = arith.constant 0 : index
    %96 = vector.load %arg7[%c0_14, %c0_15, %c0_16, %c0_17] : memref<1x16x16x8xbf16, #tpu.memory_space<vmem>>, vector<1x16x16x8xbf16>
    %97 = vector.shape_cast %96 : vector<1x16x16x8xbf16> to vector<16x16x8xbf16>
    %98 = vector.shape_cast %95 : vector<16x16x8xbf16> to vector<1x16x16x8xbf16>
    tpu.vector_store %arg7[%c0_14, %c0_15, %c0_16, %c0_17], %98 {strides = array<i32>} : memref<1x16x16x8xbf16, #tpu.memory_space<vmem>>, vector<1x16x16x8xbf16>,
    return
  }
  func.func @transform_0(%arg0: i32, %arg1: i32) -> (i32, i32, i32, i32) {
    %c1_i32 = arith.constant 1 : i32
    %0 = arith.muli %arg0, %c1_i32 : i32
    %1 = arith.addi %0, %arg1 : i32
    %c0_i32 = arith.constant 0 : i32
    %c0_i32_0 = arith.constant 0 : i32
    %c0_i32_1 = arith.constant 0 : i32
    %c0_i32_2 = arith.constant 0 : i32
    return %1, %c0_i32, %c0_i32_0, %c0_i32_1 : i32, i32, i32, i32
  }
  func.func @transform_1(%arg0: i32, %arg1: i32) -> (i32, i32) {
    %c0_i32 = arith.constant 0 : i32
    %c0_i32_0 = arith.constant 0 : i32
    %c0_i32_1 = arith.constant 0 : i32
    return %c0_i32, %c0_i32_0 : i32, i32
  }
  func.func @transform_2(%arg0: i32, %arg1: i32) -> (i32, i32) {
    %c0_i32 = arith.constant 0 : i32
    %c0_i32_0 = arith.constant 0 : i32
    %c0_i32_1 = arith.constant 0 : i32
    return %c0_i32, %c0_i32_0 : i32, i32
  }
  func.func @transform_3(%arg0: i32, %arg1: i32) -> (i32, i32) {
    %c0_i32 = arith.constant 0 : i32
    %c0_i32_0 = arith.constant 0 : i32
    %c0_i32_1 = arith.constant 0 : i32
    return %c0_i32, %c0_i32_0 : i32, i32
  }
  func.func @transform_4(%arg0: i32, %arg1: i32) -> (i32, i32) {
    %c0_i32 = arith.constant 0 : i32
    %c0_i32_0 = arith.constant 0 : i32
    %c0_i32_1 = arith.constant 0 : i32
    return %c0_i32, %c0_i32_0 : i32, i32
  }
  func.func @transform_5(%arg0: i32, %arg1: i32) -> (i32, i32, i32, i32) {
    %c0_i32 = arith.constant 0 : i32
    %c0_i32_0 = arith.constant 0 : i32
    %c0_i32_1 = arith.constant 0 : i32
    return %arg0, %arg1, %c0_i32, %c0_i32_0 : i32, i32, i32, i32
  }
}

</mosaic_0001>

<llo_original>
// kernel: tpu_custom_call.1
$region0: #{tpu_custom_call.1}
  #allocation0 [shape = 'u32[]', space=smem, size = 0x4, offset = 0x4, fixed_abs, tag = 'smem constant byte address 0x4 - core index']
  #allocation1 [shape = 'u32[72,128]{1,0:T(1,128)}', space=vmem, size = 0x9000, scoped, tag = 'internal scratch']
  %s0 = inlined_call_operand.vmem [shape: bf16[2,18,18,4], index: 0, kind: input, shape index: {}]
  %s1 = inlined_call_operand.vmem [shape: bf16[9,4], index: 1, kind: input, shape index: {}]
  %s2 = inlined_call_operand.vmem [shape: f32[1,4], index: 2, kind: input, shape index: {}]
  %s3 = inlined_call_operand.vmem [shape: bf16[4,8], index: 3, kind: input, shape index: {}]
  %s4 = inlined_call_operand.vmem [shape: f32[1,8], index: 4, kind: input, shape index: {}]
  %s5 = inlined_call_operand.vmem [shape: bf16[2,16,16,8], index: 5, kind: output, shape index: {}]
  %s6 = sld [smem:[#allocation0]]
  $region53: #{tpu_custom_call.1} parent=0
    _
  %s8 = ssub.s32 1, %s6
  %s9 = scalar_select 0, %s8, %s6
  loop: start=0, step=1, limit=4
  $region2: #{tpu_custom_call.1} parent=0 // loop_pre_header
    _
  $region3: #{tpu_custom_call.1} parent=0 // loop_header
    %s11 = sphi 0, %s15
    %p12 = scmp.ge.s32.totalorder %s11, 4
    %s18 = sphi 0, %s30
    %s19 = sphi 0, %s26
    %s20 = sphi 0, %s18
    %s21 = sphi 0, %s19
    %s22 = sphi 0, %s20
    %s23 = sphi 0, %s21
    %s35 = sphi 0, %s37
    %s38 = sphi 0, %s35
    %s39 = sphi 0, %s38
    %s55 = sphi 0, %s39
    %s59 = sphi 0, %s59
    %s61 = sphi 0, %s59
    %s62 = sphi 0, %s61
    %s76 = sphi 0, %s62
    %s80 = sphi 0, %s80
    %s82 = sphi 0, %s80
    %s83 = sphi 0, %s82
    %s97 = sphi 0, %s83
    %s101 = sphi 0, %s101
    %s103 = sphi 0, %s101
    %s104 = sphi 0, %s103
    %s118 = sphi 0, %s104
    %s122 = sphi 0, %s122
    %s124 = sphi 0, %s122
    %s125 = sphi 0, %s124
    %s139 = sphi 0, %s125
    %s147 = sphi 0, %s149
    %s150 = sphi 0, %s147
    %s151 = sphi 0, %s150
    %s167 = sphi 0, %s151
  $region4: #{tpu_custom_call.1} parent=0 // loop_header_branch
    %14 = sbr.rel (%p12) target = $region8
  $region5: #{tpu_custom_call.1} parent=0 // loop_body
    %s16 = ssub.s32 %s11, 1
    %s17 = ssub.s32 %s11, 2
    %s24 = sadd.s32 1, %s19
    %p25 = scmp.ge.s32.totalorder %s24, 1
    %s26 = scalar_select %p25, 0, %s24
    %s27 = sadd.s32 1, %s18
    %s28 = scalar_select %p25, %s27, %s18
    %p29 = scmp.ge.s32.totalorder %s28, 2
    %s30 = scalar_select %p29, 0, %s28
    %s31 = sadd.s32 %s18, %s19
    %s32 = sadd.s32 %s30, %s26
    %s33 = ssub.s32 %s31, %s32
    %p34 = scmp.eq.s32.totalorder %s33, 0
    %s36 = sadd.s32 %s35, 1
    %s37 = scalar_select %p34, %s35, %s36
    %p40 = pneg %p34
    %p41 = scmp.eq.s32.totalorder %s11, 1
    %p42 = por %p40, %p41
    %p43 = scmp.ne.s32.totalorder %s35, %s38
    %p44 = scmp.eq.s32.totalorder %s11, 0
    %p45 = por %p43, %p44
    %p46 = scmp.ne.s32.totalorder %s35, %s38
    %p47 = scmp.eq.s32.totalorder %s16, 1
    %p48 = por %p46, %p47
    %p49 = scmp.ne.s32.totalorder %s38, %s39
    %p50 = scmp.eq.s32.totalorder %s16, 0
    %p51 = por %p49, %p50
    %p52 = scmp.ne.s32.totalorder %s38, %s39
    %p53 = scmp.eq.s32.totalorder %s17, 1
    %p54 = por %p52, %p53
    %p56 = scmp.ne.s32.totalorder %s39, %s55
    %p57 = scmp.eq.s32.totalorder %s17, 0
    %p58 = por %p56, %p57
    %s60 = sadd.s32 %s59, 1
    %p63 = scmp.eq.s32.totalorder %s11, 1
    %p64 = scmp.ne.s32.totalorder %s59, %s61
    %p65 = scmp.eq.s32.totalorder %s11, 0
    %p66 = por %p64, %p65
    %p67 = scmp.ne.s32.totalorder %s59, %s61
    %p68 = scmp.eq.s32.totalorder %s16, 1
    %p69 = por %p67, %p68
    %p70 = scmp.ne.s32.totalorder %s61, %s62
    %p71 = scmp.eq.s32.totalorder %s16, 0
    %p72 = por %p70, %p71
    %p73 = scmp.ne.s32.totalorder %s61, %s62
    %p74 = scmp.eq.s32.totalorder %s17, 1
    %p75 = por %p73, %p74
    %p77 = scmp.ne.s32.totalorder %s62, %s76
    %p78 = scmp.eq.s32.totalorder %s17, 0
    %p79 = por %p77, %p78
    %s81 = sadd.s32 %s80, 1
    %p84 = scmp.eq.s32.totalorder %s11, 1
    %p85 = scmp.ne.s32.totalorder %s80, %s82
    %p86 = scmp.eq.s32.totalorder %s11, 0
    %p87 = por %p85, %p86
    %p88 = scmp.ne.s32.totalorder %s80, %s82
    %p89 = scmp.eq.s32.totalorder %s16, 1
    %p90 = por %p88, %p89
    %p91 = scmp.ne.s32.totalorder %s82, %s83
    %p92 = scmp.eq.s32.totalorder %s16, 0
    %p93 = por %p91, %p92
    %p94 = scmp.ne.s32.totalorder %s82, %s83
    %p95 = scmp.eq.s32.totalorder %s17, 1
    %p96 = por %p94, %p95
    %p98 = scmp.ne.s32.totalorder %s83, %s97
    %p99 = scmp.eq.s32.totalorder %s17, 0
    %p100 = por %p98, %p99
    %s102 = sadd.s32 %s101, 1
    %p105 = scmp.eq.s32.totalorder %s11, 1
    %p106 = scmp.ne.s32.totalorder %s101, %s103
    %p107 = scmp.eq.s32.totalorder %s11, 0
    %p108 = por %p106, %p107
    %p109 = scmp.ne.s32.totalorder %s101, %s103
    %p110 = scmp.eq.s32.totalorder %s16, 1
    %p111 = por %p109, %p110
    %p112 = scmp.ne.s32.totalorder %s103, %s104
    %p113 = scmp.eq.s32.totalorder %s16, 0
    %p114 = por %p112, %p113
    %p115 = scmp.ne.s32.totalorder %s103, %s104
    %p116 = scmp.eq.s32.totalorder %s17, 1
    %p117 = por %p115, %p116
    %p119 = scmp.ne.s32.totalorder %s104, %s118
    %p120 = scmp.eq.s32.totalorder %s17, 0
    %p121 = por %p119, %p120
    %s123 = sadd.s32 %s122, 1
    %p126 = scmp.eq.s32.totalorder %s11, 1
    %p127 = scmp.ne.s32.totalorder %s122, %s124
    %p128 = scmp.eq.s32.totalorder %s11, 0
    %p129 = por %p127, %p128
    %p130 = scmp.ne.s32.totalorder %s122, %s124
    %p131 = scmp.eq.s32.totalorder %s16, 1
    %p132 = por %p130, %p131
    %p133 = scmp.ne.s32.totalorder %s124, %s125
    %p134 = scmp.eq.s32.totalorder %s16, 0
    %p135 = por %p133, %p134
    %p136 = scmp.ne.s32.totalorder %s124, %s125
    %p137 = scmp.eq.s32.totalorder %s17, 1
    %p138 = por %p136, %p137
    %p140 = scmp.ne.s32.totalorder %s125, %s139
    %p141 = scmp.eq.s32.totalorder %s17, 0
    %p142 = por %p140, %p141
    %s143 = ssub.s32 %s18, %s30
    %s144 = ssub.s32 %s19, %s26
    %s145 = sor.u32 %s143, %s144
    %p146 = scmp.eq.s32.totalorder %s145, 0
    %s148 = sadd.s32 %s147, 1
    %s149 = scalar_select %p146, %s147, %s148
    %p152 = pneg %p146
    %p153 = scmp.eq.s32.totalorder %s11, 1
    %p154 = por %p152, %p153
    %p155 = scmp.ne.s32.totalorder %s147, %s150
    %p156 = scmp.eq.s32.totalorder %s11, 0
    %p157 = por %p155, %p156
    %p158 = scmp.ne.s32.totalorder %s147, %s150
    %p159 = scmp.eq.s32.totalorder %s16, 1
    %p160 = por %p158, %p159
    %p161 = scmp.ne.s32.totalorder %s150, %s151
    %p162 = scmp.eq.s32.totalorder %s16, 0
    %p163 = por %p161, %p162
    %p164 = scmp.ne.s32.totalorder %s150, %s151
    %p165 = scmp.eq.s32.totalorder %s17, 1
    %p166 = por %p164, %p165
    %p168 = scmp.ne.s32.totalorder %s151, %s167
    %p169 = scmp.eq.s32.totalorder %s17, 0
    %p170 = por %p168, %p169
    %p171 = scmp.le.s32.totalorder 1, %s11
    %p172 = scmp.lt.s32.totalorder %s11, 3
    %p173 = pnand %p171, %p172
    %p174 = pneg %p173
    // Predicated region
    $region9: #{tpu_custom_call.1} parent=5 // pred_check
      _
    $region10: #{tpu_custom_call.1} parent=5 // pred_check_branch
      %176 = sbr.rel (%p173) target = $region12
    $region11: #{tpu_custom_call.1} parent=5 // pred_region
      %s177 = ssub.s32 %s11, 1
      // Predicated region
      $region13: #{tpu_custom_call.1} parent=11 // pred_check
        %p178 = pneg %p72
      $region14: #{tpu_custom_call.1} parent=11 // pred_check_branch
        %180 = sbr.rel (%p178) target = $region16
      $region15: #{tpu_custom_call.1} parent=11 // pred_region
        _
      $region16: #{tpu_custom_call.1} parent=11 // pred_fallthru
        _
      // Predicated region
      $region17: #{tpu_custom_call.1} parent=11 // pred_check
        %p181 = pneg %p93
      $region18: #{tpu_custom_call.1} parent=11 // pred_check_branch
        %183 = sbr.rel (%p181) target = $region20
      $region19: #{tpu_custom_call.1} parent=11 // pred_region
        _
      $region20: #{tpu_custom_call.1} parent=11 // pred_fallthru
        _
      // Predicated region
      $region21: #{tpu_custom_call.1} parent=11 // pred_check
        %p184 = pneg %p114
      $region22: #{tpu_custom_call.1} parent=11 // pred_check_branch
        %186 = sbr.rel (%p184) target = $region24
      $region23: #{tpu_custom_call.1} parent=11 // pred_region
        _
      $region24: #{tpu_custom_call.1} parent=11 // pred_fallthru
        _
      // Predicated region
      $region25: #{tpu_custom_call.1} parent=11 // pred_check
        %p187 = pneg %p135
      $region26: #{tpu_custom_call.1} parent=11 // pred_check_branch
        %189 = sbr.rel (%p187) target = $region28
      $region27: #{tpu_custom_call.1} parent=11 // pred_region
        _
      $region28: #{tpu_custom_call.1} parent=11 // pred_fallthru
        _
    $region12: #{tpu_custom_call.1} parent=5 // pred_fallthru
      _
    %p190 = scmp.lt.s32.totalorder %s11, 2
    // Predicated region
    $region29: #{tpu_custom_call.1} parent=5 // pred_check
      %p191 = pneg %p190
    $region30: #{tpu_custom_call.1} parent=5 // pred_check_branch
      %193 = sbr.rel (%p191) target = $region32
    $region31: #{tpu_custom_call.1} parent=5 // pred_region
      // Predicated region
      $region33: #{tpu_custom_call.1} parent=31 // pred_check
        %p194 = pneg %p45
      $region34: #{tpu_custom_call.1} parent=31 // pred_check_branch
        %196 = sbr.rel (%p194) target = $region36
      $region35: #{tpu_custom_call.1} parent=31 // pred_region
        %s197 = sadd.s32 %s18, %s19
        %p198 = scmp.lt.s32.totalorder %s197, 1
        %s199 = scalar_select %p198, %s197, 1
        %s200 = smul.addr %s199, 54
        %s201 = smul.addr %s200, 4
        %s202 = scalar_lea.vmem %s0, %s201
        %s203 = sadd.s32 %s18, %s19
      $region36: #{tpu_custom_call.1} parent=31 // pred_fallthru
        _
    $region32: #{tpu_custom_call.1} parent=5 // pred_fallthru
      _
    %p204 = scmp.le.s32.totalorder 1, %s11
    %p205 = scmp.lt.s32.totalorder %s11, 3
    %p206 = pnand %p204, %p205
    %p207 = pneg %p206
    // Predicated region
    $region37: #{tpu_custom_call.1} parent=5 // pred_check
      _
    $region38: #{tpu_custom_call.1} parent=5 // pred_check_branch
      %209 = sbr.rel (%p206) target = $region40
    $region39: #{tpu_custom_call.1} parent=5 // pred_region
      %s210 = ssub.s32 %s11, 1
      %s211 = sadd.s32 %s20, %s21
      %p212 = scmp.lt.s32.totalorder %s211, 1
      %s213 = scalar_select %p212, %s211, 1
      %s214 = smul.addr %s213, 54
      %s215 = smul.addr %s214, 4
      %s216 = scalar_lea.vmem %s0, %s215
      %p217 = pneg %p51
      %p218 = pneg %p48
      %p219 = pneg %p72
      %p220 = pneg %p69
      %p221 = pneg %p93
      %p222 = pneg %p90
      %p223 = pneg %p114
      %p224 = pneg %p111
      %p225 = pneg %p135
      %p226 = pneg %p132
      %p227 = pneg %p163
      %p228 = pneg %p160
      %s229 = smul.u32 16, %s21
      %p230 = scmp.lt.s32.totalorder %s20, 1
      %s231 = scalar_select %p230, %s20, 1
      %p232 = scmp.lt.s32.totalorder %s229, 15
      %s233 = scalar_select %p232, %s229, 15
      %s234 = smul.addr %s233, 2
      %s235 = smul.addr %s231, 32
      %s236 = sadd.s32 %s234, %s235
      %s237 = smul.addr %s236, 4
      %s238 = scalar_lea.vmem %s5, %s237
      %s239 = sadd.s32 %s20, %s21
      %p240 = scmp.lt.s32.totalorder %s239, 1
      %s241 = scalar_select %p240, %s239, 1
      %s242 = smul.addr %s241, 54
      %s243 = smul.addr %s242, 4
      %s244 = scalar_lea.vmem %s0, %s243
      %s245 = sadd.s32 %s20, %s21
      %s246 = smul.u32 16, %s21
      %p247 = scmp.lt.s32.totalorder %s20, 1
      %s248 = scalar_select %p247, %s20, 1
      %p249 = scmp.lt.s32.totalorder %s246, 15
      %s250 = scalar_select %p249, %s246, 15
      %s251 = smul.addr %s250, 2
      %s252 = smul.addr %s248, 32
      %s253 = sadd.s32 %s251, %s252
      %s254 = smul.addr %s253, 4
      %s255 = scalar_lea.vmem %s5, %s254
      %s256 = smul.u32 16, %s21
      %v258 = vld [vmem:[%s244] sm:$0xf]
      %v259 = vld [vmem:[%s244 + $0x4] sm:$0xf]
      %v260 = vld [vmem:[%s244 + $0x8] sm:$0x1]
      %v261 = vld [vmem:[%s244 + $0xc] sm:$0xf]
      %v262 = vld [vmem:[%s244 + $0x10] sm:$0xf]
      %v263 = vld [vmem:[%s244 + $0x14] sm:$0x1]
      %v264 = vld [vmem:[%s244 + $0x18] sm:$0xf]
      %v265 = vld [vmem:[%s244 + $0x1c] sm:$0xf]
      %v266 = vld [vmem:[%s244 + $0x20] sm:$0x1]
      %v267 = vld [vmem:[%s244 + $0x24] sm:$0xf]
      %v268 = vld [vmem:[%s244 + $0x28] sm:$0xf]
      %v269 = vld [vmem:[%s244 + $0x2c] sm:$0x1]
      %v270 = vld [vmem:[%s244 + $0x30] sm:$0xf]
      %v271 = vld [vmem:[%s244 + $0x34] sm:$0xf]
      %v272 = vld [vmem:[%s244 + $0x38] sm:$0x1]
      %v273 = vld [vmem:[%s244 + $0x3c] sm:$0xf]
      %v274 = vld [vmem:[%s244 + $0x40] sm:$0xf]
      %v275 = vld [vmem:[%s244 + $0x44] sm:$0x1]
      %v276 = vld [vmem:[%s244 + $0x48] sm:$0xf]
      %v277 = vld [vmem:[%s244 + $0x4c] sm:$0xf]
      %v278 = vld [vmem:[%s244 + $0x50] sm:$0x1]
      %v279 = vld [vmem:[%s244 + $0x54] sm:$0xf]
      %v280 = vld [vmem:[%s244 + $0x58] sm:$0xf]
      %v281 = vld [vmem:[%s244 + $0x5c] sm:$0x1]
      %v282 = vld [vmem:[%s244 + $0x60] sm:$0xf]
      %v283 = vld [vmem:[%s244 + $0x64] sm:$0xf]
      %v284 = vld [vmem:[%s244 + $0x68] sm:$0x1]
      %v285 = vld [vmem:[%s244 + $0x6c] sm:$0xf]
      %v286 = vld [vmem:[%s244 + $0x70] sm:$0xf]
      %v287 = vld [vmem:[%s244 + $0x74] sm:$0x1]
      %v288 = vld [vmem:[%s244 + $0x78] sm:$0xf]
      %v289 = vld [vmem:[%s244 + $0x7c] sm:$0xf]
      %v290 = vld [vmem:[%s244 + $0x80] sm:$0x1]
      %v291 = vld [vmem:[%s244 + $0x84] sm:$0xf]
      %v292 = vld [vmem:[%s244 + $0x88] sm:$0xf]
      %v293 = vld [vmem:[%s244 + $0x8c] sm:$0x1]
      %v294 = vld [vmem:[%s244 + $0x90] sm:$0xf]
      %v295 = vld [vmem:[%s244 + $0x94] sm:$0xf]
      %v296 = vld [vmem:[%s244 + $0x98] sm:$0x1]
      %v297 = vld [vmem:[%s244 + $0x9c] sm:$0xf]
      %v298 = vld [vmem:[%s244 + $0xa0] sm:$0xf]
      %v299 = vld [vmem:[%s244 + $0xa4] sm:$0x1]
      %v300 = vld [vmem:[%s244 + $0xa8] sm:$0xf]
      %v301 = vld [vmem:[%s244 + $0xac] sm:$0xf]
      %v302 = vld [vmem:[%s244 + $0xb0] sm:$0x1]
      %v303 = vld [vmem:[%s244 + $0xb4] sm:$0xf]
      %v304 = vld [vmem:[%s244 + $0xb8] sm:$0xf]
      %v305 = vld [vmem:[%s244 + $0xbc] sm:$0x1]
      %v306 = vld [vmem:[%s244 + $0xc0] sm:$0xf]
      %v307 = vld [vmem:[%s244 + $0xc4] sm:$0xf]
      %v308 = vld [vmem:[%s244 + $0xc8] sm:$0x1]
      %v309 = vld [vmem:[%s244 + $0xcc] sm:$0xf]
      %v310 = vld [vmem:[%s244 + $0xd0] sm:$0xf]
      %v311 = vld [vmem:[%s244 + $0xd4] sm:$0x1]
      %v312 = vld [vmem:[%s1] sm:$0xf]
      %v313 = vld [vmem:[%s1 + $0x4] sm:$0x1]
      %v315 = vpack.i.b16 %v312, %v312
      %v317 = vperm.slane %v315, 0
      %v318 = vunpack.c.l.bf16 %v258
      %v319 = vunpack.c.l.bf16 %v259
      %v320 = vunpack.c.l.bf16 %v261
      %v321 = vunpack.c.l.bf16 %v262
      %v322 = vunpack.c.l.bf16 %v264
      %v323 = vunpack.c.l.bf16 %v265
      %v324 = vunpack.c.l.bf16 %v267
      %v325 = vunpack.c.l.bf16 %v268
      %v326 = vunpack.c.l.bf16 %v270
      %v327 = vunpack.c.l.bf16 %v271
      %v328 = vunpack.c.l.bf16 %v273
      %v329 = vunpack.c.l.bf16 %v274
      %v330 = vunpack.c.l.bf16 %v276
      %v331 = vunpack.c.l.bf16 %v277
      %v332 = vunpack.c.l.bf16 %v279
      %v333 = vunpack.c.l.bf16 %v280
      %v334 = vunpack.c.l.bf16 %v282
      %v335 = vunpack.c.l.bf16 %v283
      %v336 = vunpack.c.l.bf16 %v285
      %v337 = vunpack.c.l.bf16 %v286
      %v338 = vunpack.c.l.bf16 %v288
      %v339 = vunpack.c.l.bf16 %v289
      %v340 = vunpack.c.l.bf16 %v291
      %v341 = vunpack.c.l.bf16 %v292
      %v342 = vunpack.c.l.bf16 %v294
      %v343 = vunpack.c.l.bf16 %v295
      %v344 = vunpack.c.l.bf16 %v297
      %v345 = vunpack.c.l.bf16 %v298
      %v346 = vunpack.c.l.bf16 %v300
      %v347 = vunpack.c.l.bf16 %v301
      %v348 = vunpack.c.l.bf16 %v303
      %v349 = vunpack.c.l.bf16 %v304
      %v350 = vunpack.c.l.bf16 %v317
      %v351 = vmul.f32 %v318, %v350
      %v352 = vmul.f32 %v319, %v350
      %v353 = vmul.f32 %v320, %v350
      %v354 = vmul.f32 %v321, %v350
      %v355 = vmul.f32 %v322, %v350
      %v356 = vmul.f32 %v323, %v350
      %v357 = vmul.f32 %v324, %v350
      %v358 = vmul.f32 %v325, %v350
      %v359 = vmul.f32 %v326, %v350
      %v360 = vmul.f32 %v327, %v350
      %v361 = vmul.f32 %v328, %v350
      %v362 = vmul.f32 %v329, %v350
      %v363 = vmul.f32 %v330, %v350
      %v364 = vmul.f32 %v331, %v350
      %v365 = vmul.f32 %v332, %v350
      %v366 = vmul.f32 %v333, %v350
      %v367 = vmul.f32 %v334, %v350
      %v368 = vmul.f32 %v335, %v350
      %v369 = vmul.f32 %v336, %v350
      %v370 = vmul.f32 %v337, %v350
      %v371 = vmul.f32 %v338, %v350
      %v372 = vmul.f32 %v339, %v350
      %v373 = vmul.f32 %v340, %v350
      %v374 = vmul.f32 %v341, %v350
      %v375 = vmul.f32 %v342, %v350
      %v376 = vmul.f32 %v343, %v350
      %v377 = vmul.f32 %v344, %v350
      %v378 = vmul.f32 %v345, %v350
      %v379 = vmul.f32 %v346, %v350
      %v380 = vmul.f32 %v347, %v350
      %v381 = vmul.f32 %v348, %v350
      %v382 = vmul.f32 %v349, %v350
      %v383 = vpack.c.bf16 %v351, %v351
      %v384 = vpack.c.bf16 %v352, %v352
      %v385 = vpack.c.bf16 %v353, %v353
      %v386 = vpack.c.bf16 %v354, %v354
      %v387 = vpack.c.bf16 %v355, %v355
      %v388 = vpack.c.bf16 %v356, %v356
      %v389 = vpack.c.bf16 %v357, %v357
      %v390 = vpack.c.bf16 %v358, %v358
      %v391 = vpack.c.bf16 %v359, %v359
      %v392 = vpack.c.bf16 %v360, %v360
      %v393 = vpack.c.bf16 %v361, %v361
      %v394 = vpack.c.bf16 %v362, %v362
      %v395 = vpack.c.bf16 %v363, %v363
      %v396 = vpack.c.bf16 %v364, %v364
      %v397 = vpack.c.bf16 %v365, %v365
      %v398 = vpack.c.bf16 %v366, %v366
      %v399 = vpack.c.bf16 %v367, %v367
      %v400 = vpack.c.bf16 %v368, %v368
      %v401 = vpack.c.bf16 %v369, %v369
      %v402 = vpack.c.bf16 %v370, %v370
      %v403 = vpack.c.bf16 %v371, %v371
      %v404 = vpack.c.bf16 %v372, %v372
      %v405 = vpack.c.bf16 %v373, %v373
      %v406 = vpack.c.bf16 %v374, %v374
      %v407 = vpack.c.bf16 %v375, %v375
      %v408 = vpack.c.bf16 %v376, %v376
      %v409 = vpack.c.bf16 %v377, %v377
      %v410 = vpack.c.bf16 %v378, %v378
      %v411 = vpack.c.bf16 %v379, %v379
      %v412 = vpack.c.bf16 %v380, %v380
      %v413 = vpack.c.bf16 %v381, %v381
      %v414 = vpack.c.bf16 %v382, %v382
      %v415 = vunpack.c.l.bf16 %v383
      %v416 = vunpack.c.l.bf16 %v384
      %v417 = vunpack.c.l.bf16 %v385
      %v418 = vunpack.c.l.bf16 %v386
      %v419 = vunpack.c.l.bf16 %v387
      %v420 = vunpack.c.l.bf16 %v388
      %v421 = vunpack.c.l.bf16 %v389
      %v422 = vunpack.c.l.bf16 %v390
      %v423 = vunpack.c.l.bf16 %v391
      %v424 = vunpack.c.l.bf16 %v392
      %v425 = vunpack.c.l.bf16 %v393
      %v426 = vunpack.c.l.bf16 %v394
      %v427 = vunpack.c.l.bf16 %v395
      %v428 = vunpack.c.l.bf16 %v396
      %v429 = vunpack.c.l.bf16 %v397
      %v430 = vunpack.c.l.bf16 %v398
      %v431 = vunpack.c.l.bf16 %v399
      %v432 = vunpack.c.l.bf16 %v400
      %v433 = vunpack.c.l.bf16 %v401
      %v434 = vunpack.c.l.bf16 %v402
      %v435 = vunpack.c.l.bf16 %v403
      %v436 = vunpack.c.l.bf16 %v404
      %v437 = vunpack.c.l.bf16 %v405
      %v438 = vunpack.c.l.bf16 %v406
      %v439 = vunpack.c.l.bf16 %v407
      %v440 = vunpack.c.l.bf16 %v408
      %v441 = vunpack.c.l.bf16 %v409
      %v442 = vunpack.c.l.bf16 %v410
      %v443 = vunpack.c.l.bf16 %v411
      %v444 = vunpack.c.l.bf16 %v412
      %v445 = vunpack.c.l.bf16 %v413
      %v446 = vunpack.c.l.bf16 %v414
      %v447 = vadd.f32 %v415, 0.0
      %v448 = vadd.f32 %v416, 0.0
      %v449 = vadd.f32 %v417, 0.0
      %v450 = vadd.f32 %v418, 0.0
      %v451 = vadd.f32 %v419, 0.0
      %v452 = vadd.f32 %v420, 0.0
      %v453 = vadd.f32 %v421, 0.0
      %v454 = vadd.f32 %v422, 0.0
      %v455 = vadd.f32 %v423, 0.0
      %v456 = vadd.f32 %v424, 0.0
      %v457 = vadd.f32 %v425, 0.0
      %v458 = vadd.f32 %v426, 0.0
      %v459 = vadd.f32 %v427, 0.0
      %v460 = vadd.f32 %v428, 0.0
      %v461 = vadd.f32 %v429, 0.0
      %v462 = vadd.f32 %v430, 0.0
      %v463 = vadd.f32 %v431, 0.0
      %v464 = vadd.f32 %v432, 0.0
      %v465 = vadd.f32 %v433, 0.0
      %v466 = vadd.f32 %v434, 0.0
      %v467 = vadd.f32 %v435, 0.0
      %v468 = vadd.f32 %v436, 0.0
      %v469 = vadd.f32 %v437, 0.0
      %v470 = vadd.f32 %v438, 0.0
      %v471 = vadd.f32 %v439, 0.0
      %v472 = vadd.f32 %v440, 0.0
      %v473 = vadd.f32 %v441, 0.0
      %v474 = vadd.f32 %v442, 0.0
      %v475 = vadd.f32 %v443, 0.0
      %v476 = vadd.f32 %v444, 0.0
      %v477 = vadd.f32 %v445, 0.0
      %v478 = vadd.f32 %v446, 0.0
      %v479 = vshrl.u32 %v312, 16
      %v480 = vpack.i.b16 %v479, %v479
      %v482 = vperm.slane %v480, 0
      %v483 = vunpack.c.l.bf16 %v260
      %v484 = vunpack.c.l.bf16 %v263
      %v485 = vunpack.c.l.bf16 %v266
      %v486 = vunpack.c.l.bf16 %v269
      %v487 = vunpack.c.l.bf16 %v272
      %v488 = vunpack.c.l.bf16 %v275
      %v489 = vunpack.c.l.bf16 %v278
      %v490 = vunpack.c.l.bf16 %v281
      %v491 = vunpack.c.l.bf16 %v284
      %v492 = vunpack.c.l.bf16 %v287
      %v493 = vunpack.c.l.bf16 %v290
      %v494 = vunpack.c.l.bf16 %v293
      %v495 = vunpack.c.l.bf16 %v296
      %v496 = vunpack.c.l.bf16 %v299
      %v497 = vunpack.c.l.bf16 %v302
      %v498 = vunpack.c.l.bf16 %v305
      %v499 = vunpack.c.l.bf16 %v482
      %v500 = vmul.f32 %v318, %v499
      %v501 = vmul.f32 %v319, %v499
      %v502 = vmul.f32 %v483, %v499
      %v503 = vmul.f32 %v320, %v499
      %v504 = vmul.f32 %v321, %v499
      %v505 = vmul.f32 %v484, %v499
      %v506 = vmul.f32 %v322, %v499
      %v507 = vmul.f32 %v323, %v499
      %v508 = vmul.f32 %v485, %v499
      %v509 = vmul.f32 %v324, %v499
      %v510 = vmul.f32 %v325, %v499
      %v511 = vmul.f32 %v486, %v499
      %v512 = vmul.f32 %v326, %v499
      %v513 = vmul.f32 %v327, %v499
      %v514 = vmul.f32 %v487, %v499
      %v515 = vmul.f32 %v328, %v499
      %v516 = vmul.f32 %v329, %v499
      %v517 = vmul.f32 %v488, %v499
      %v518 = vmul.f32 %v330, %v499
      %v519 = vmul.f32 %v331, %v499
      %v520 = vmul.f32 %v489, %v499
      %v521 = vmul.f32 %v332, %v499
      %v522 = vmul.f32 %v333, %v499
      %v523 = vmul.f32 %v490, %v499
      %v524 = vmul.f32 %v334, %v499
      %v525 = vmul.f32 %v335, %v499
      %v526 = vmul.f32 %v491, %v499
      %v527 = vmul.f32 %v336, %v499
      %v528 = vmul.f32 %v337, %v499
      %v529 = vmul.f32 %v492, %v499
      %v530 = vmul.f32 %v338, %v499
      %v531 = vmul.f32 %v339, %v499
      %v532 = vmul.f32 %v493, %v499
      %v533 = vmul.f32 %v340, %v499
      %v534 = vmul.f32 %v341, %v499
      %v535 = vmul.f32 %v494, %v499
      %v536 = vmul.f32 %v342, %v499
      %v537 = vmul.f32 %v343, %v499
      %v538 = vmul.f32 %v495, %v499
      %v539 = vmul.f32 %v344, %v499
      %v540 = vmul.f32 %v345, %v499
      %v541 = vmul.f32 %v496, %v499
      %v542 = vmul.f32 %v346, %v499
      %v543 = vmul.f32 %v347, %v499
      %v544 = vmul.f32 %v497, %v499
      %v545 = vmul.f32 %v348, %v499
      %v546 = vmul.f32 %v349, %v499
      %v547 = vmul.f32 %v498, %v499
      %v548 = vpack.c.bf16 %v500, %v500
      %v549 = vpack.c.bf16 %v501, %v501
      %v550 = vpack.c.bf16 %v502, %v502
      %v551 = vpack.c.bf16 %v503, %v503
      %v552 = vpack.c.bf16 %v504, %v504
      %v553 = vpack.c.bf16 %v505, %v505
      %v554 = vpack.c.bf16 %v506, %v506
      %v555 = vpack.c.bf16 %v507, %v507
      %v556 = vpack.c.bf16 %v508, %v508
      %v557 = vpack.c.bf16 %v509, %v509
      %v558 = vpack.c.bf16 %v510, %v510
      %v559 = vpack.c.bf16 %v511, %v511
      %v560 = vpack.c.bf16 %v512, %v512
      %v561 = vpack.c.bf16 %v513, %v513
      %v562 = vpack.c.bf16 %v514, %v514
      %v563 = vpack.c.bf16 %v515, %v515
      %v564 = vpack.c.bf16 %v516, %v516
      %v565 = vpack.c.bf16 %v517, %v517
      %v566 = vpack.c.bf16 %v518, %v518
      %v567 = vpack.c.bf16 %v519, %v519
      %v568 = vpack.c.bf16 %v520, %v520
      %v569 = vpack.c.bf16 %v521, %v521
      %v570 = vpack.c.bf16 %v522, %v522
      %v571 = vpack.c.bf16 %v523, %v523
      %v572 = vpack.c.bf16 %v524, %v524
      %v573 = vpack.c.bf16 %v525, %v525
      %v574 = vpack.c.bf16 %v526, %v526
      %v575 = vpack.c.bf16 %v527, %v527
      %v576 = vpack.c.bf16 %v528, %v528
      %v577 = vpack.c.bf16 %v529, %v529
      %v578 = vpack.c.bf16 %v530, %v530
      %v579 = vpack.c.bf16 %v531, %v531
      %v580 = vpack.c.bf16 %v532, %v532
      %v581 = vpack.c.bf16 %v533, %v533
      %v582 = vpack.c.bf16 %v534, %v534
      %v583 = vpack.c.bf16 %v535, %v535
      %v584 = vpack.c.bf16 %v536, %v536
      %v585 = vpack.c.bf16 %v537, %v537
      %v586 = vpack.c.bf16 %v538, %v538
      %v587 = vpack.c.bf16 %v539, %v539
      %v588 = vpack.c.bf16 %v540, %v540
      %v589 = vpack.c.bf16 %v541, %v541
      %v590 = vpack.c.bf16 %v542, %v542
      %v591 = vpack.c.bf16 %v543, %v543
      %v592 = vpack.c.bf16 %v544, %v544
      %v593 = vpack.c.bf16 %v545, %v545
      %v594 = vpack.c.bf16 %v546, %v546
      %v595 = vpack.c.bf16 %v547, %v547
      %v596 = vunpack.c.l.bf16 %v548
      %v597 = vunpack.c.l.bf16 %v549
      %v598 = vunpack.c.l.bf16 %v550
      %v599 = vunpack.c.l.bf16 %v551
      %v600 = vunpack.c.l.bf16 %v552
      %v601 = vunpack.c.l.bf16 %v553
      %v602 = vunpack.c.l.bf16 %v554
      %v603 = vunpack.c.l.bf16 %v555
      %v604 = vunpack.c.l.bf16 %v556
      %v605 = vunpack.c.l.bf16 %v557
      %v606 = vunpack.c.l.bf16 %v558
      %v607 = vunpack.c.l.bf16 %v559
      %v608 = vunpack.c.l.bf16 %v560
      %v609 = vunpack.c.l.bf16 %v561
      %v610 = vunpack.c.l.bf16 %v562
      %v611 = vunpack.c.l.bf16 %v563
      %v612 = vunpack.c.l.bf16 %v564
      %v613 = vunpack.c.l.bf16 %v565
      %v614 = vunpack.c.l.bf16 %v566
      %v615 = vunpack.c.l.bf16 %v567
      %v616 = vunpack.c.l.bf16 %v568
      %v617 = vunpack.c.l.bf16 %v569
      %v618 = vunpack.c.l.bf16 %v570
      %v619 = vunpack.c.l.bf16 %v571
      %v620 = vunpack.c.l.bf16 %v572
      %v621 = vunpack.c.l.bf16 %v573
      %v622 = vunpack.c.l.bf16 %v574
      %v623 = vunpack.c.l.bf16 %v575
      %v624 = vunpack.c.l.bf16 %v576
      %v625 = vunpack.c.l.bf16 %v577
      %v626 = vunpack.c.l.bf16 %v578
      %v627 = vunpack.c.l.bf16 %v579
      %v628 = vunpack.c.l.bf16 %v580
      %v629 = vunpack.c.l.bf16 %v581
      %v630 = vunpack.c.l.bf16 %v582
      %v631 = vunpack.c.l.bf16 %v583
      %v632 = vunpack.c.l.bf16 %v584
      %v633 = vunpack.c.l.bf16 %v585
      %v634 = vunpack.c.l.bf16 %v586
      %v635 = vunpack.c.l.bf16 %v587
      %v636 = vunpack.c.l.bf16 %v588
      %v637 = vunpack.c.l.bf16 %v589
      %v638 = vunpack.c.l.bf16 %v590
      %v639 = vunpack.c.l.bf16 %v591
      %v640 = vunpack.c.l.bf16 %v592
      %v641 = vunpack.c.l.bf16 %v593
      %v642 = vunpack.c.l.bf16 %v594
      %v643 = vunpack.c.l.bf16 %v595
      %vm692 = vcmask 1046528
      %v693 = vrot.slane %v596, 1
      %v694 = vrot.slane %v597, 1
      %v695 = vsel %vm692, %v693, %v694
      %v696 = vrot.slane %v598, 1
      %v697 = vsel %vm692, %v694, %v696
      %v698 = vrot.slane %v599, 1
      %v699 = vrot.slane %v600, 1
      %v700 = vsel %vm692, %v698, %v699
      %v701 = vrot.slane %v601, 1
      %v702 = vsel %vm692, %v699, %v701
      %v703 = vrot.slane %v602, 1
      %v704 = vrot.slane %v603, 1
      %v705 = vsel %vm692, %v703, %v704
      %v706 = vrot.slane %v604, 1
      %v707 = vsel %vm692, %v704, %v706
      %v708 = vrot.slane %v605, 1
      %v709 = vrot.slane %v606, 1
      %v710 = vsel %vm692, %v708, %v709
      %v711 = vrot.slane %v607, 1
      %v712 = vsel %vm692, %v709, %v711
      %v713 = vrot.slane %v608, 1
      %v714 = vrot.slane %v609, 1
      %v715 = vsel %vm692, %v713, %v714
      %v716 = vrot.slane %v610, 1
      %v717 = vsel %vm692, %v714, %v716
      %v718 = vrot.slane %v611, 1
      %v719 = vrot.slane %v612, 1
      %v720 = vsel %vm692, %v718, %v719
      %v721 = vrot.slane %v613, 1
      %v722 = vsel %vm692, %v719, %v721
      %v723 = vrot.slane %v614, 1
      %v724 = vrot.slane %v615, 1
      %v725 = vsel %vm692, %v723, %v724
      %v726 = vrot.slane %v616, 1
      %v727 = vsel %vm692, %v724, %v726
      %v728 = vrot.slane %v617, 1
      %v729 = vrot.slane %v618, 1
      %v730 = vsel %vm692, %v728, %v729
      %v731 = vrot.slane %v619, 1
      %v732 = vsel %vm692, %v729, %v731
      %v733 = vrot.slane %v620, 1
      %v734 = vrot.slane %v621, 1
      %v735 = vsel %vm692, %v733, %v734
      %v736 = vrot.slane %v622, 1
      %v737 = vsel %vm692, %v734, %v736
      %v738 = vrot.slane %v623, 1
      %v739 = vrot.slane %v624, 1
      %v740 = vsel %vm692, %v738, %v739
      %v741 = vrot.slane %v625, 1
      %v742 = vsel %vm692, %v739, %v741
      %v743 = vrot.slane %v626, 1
      %v744 = vrot.slane %v627, 1
      %v745 = vsel %vm692, %v743, %v744
      %v746 = vrot.slane %v628, 1
      %v747 = vsel %vm692, %v744, %v746
      %v748 = vrot.slane %v629, 1
      %v749 = vrot.slane %v630, 1
      %v750 = vsel %vm692, %v748, %v749
      %v751 = vrot.slane %v631, 1
      %v752 = vsel %vm692, %v749, %v751
      %v753 = vrot.slane %v632, 1
      %v754 = vrot.slane %v633, 1
      %v755 = vsel %vm692, %v753, %v754
      %v756 = vrot.slane %v634, 1
      %v757 = vsel %vm692, %v754, %v756
      %v758 = vrot.slane %v635, 1
      %v759 = vrot.slane %v636, 1
      %v760 = vsel %vm692, %v758, %v759
      %v761 = vrot.slane %v637, 1
      %v762 = vsel %vm692, %v759, %v761
      %v763 = vrot.slane %v638, 1
      %v764 = vrot.slane %v639, 1
      %v765 = vsel %vm692, %v763, %v764
      %v766 = vrot.slane %v640, 1
      %v767 = vsel %vm692, %v764, %v766
      %v768 = vrot.slane %v641, 1
      %v769 = vrot.slane %v642, 1
      %v770 = vsel %vm692, %v768, %v769
      %v771 = vrot.slane %v643, 1
      %v772 = vsel %vm692, %v769, %v771
      %v805 = vadd.f32 %v447, %v695
      %v806 = vadd.f32 %v448, %v697
      %v807 = vadd.f32 %v449, %v700
      %v808 = vadd.f32 %v450, %v702
      %v809 = vadd.f32 %v451, %v705
      %v810 = vadd.f32 %v452, %v707
      %v811 = vadd.f32 %v453, %v710
      %v812 = vadd.f32 %v454, %v712
      %v813 = vadd.f32 %v455, %v715
      %v814 = vadd.f32 %v456, %v717
      %v815 = vadd.f32 %v457, %v720
      %v816 = vadd.f32 %v458, %v722
      %v817 = vadd.f32 %v459, %v725
      %v818 = vadd.f32 %v460, %v727
      %v819 = vadd.f32 %v461, %v730
      %v820 = vadd.f32 %v462, %v732
      %v821 = vadd.f32 %v463, %v735
      %v822 = vadd.f32 %v464, %v737
      %v823 = vadd.f32 %v465, %v740
      %v824 = vadd.f32 %v466, %v742
      %v825 = vadd.f32 %v467, %v745
      %v826 = vadd.f32 %v468, %v747
      %v827 = vadd.f32 %v469, %v750
      %v828 = vadd.f32 %v470, %v752
      %v829 = vadd.f32 %v471, %v755
      %v830 = vadd.f32 %v472, %v757
      %v831 = vadd.f32 %v473, %v760
      %v832 = vadd.f32 %v474, %v762
      %v833 = vadd.f32 %v475, %v765
      %v834 = vadd.f32 %v476, %v767
      %v835 = vadd.f32 %v477, %v770
      %v836 = vadd.f32 %v478, %v772
      %v837 = vperm.slane %v315, 1
      %v838 = vunpack.c.l.bf16 %v837
      %v839 = vmul.f32 %v318, %v838
      %v840 = vmul.f32 %v319, %v838
      %v841 = vmul.f32 %v483, %v838
      %v842 = vmul.f32 %v320, %v838
      %v843 = vmul.f32 %v321, %v838
      %v844 = vmul.f32 %v484, %v838
      %v845 = vmul.f32 %v322, %v838
      %v846 = vmul.f32 %v323, %v838
      %v847 = vmul.f32 %v485, %v838
      %v848 = vmul.f32 %v324, %v838
      %v849 = vmul.f32 %v325, %v838
      %v850 = vmul.f32 %v486, %v838
      %v851 = vmul.f32 %v326, %v838
      %v852 = vmul.f32 %v327, %v838
      %v853 = vmul.f32 %v487, %v838
      %v854 = vmul.f32 %v328, %v838
      %v855 = vmul.f32 %v329, %v838
      %v856 = vmul.f32 %v488, %v838
      %v857 = vmul.f32 %v330, %v838
      %v858 = vmul.f32 %v331, %v838
      %v859 = vmul.f32 %v489, %v838
      %v860 = vmul.f32 %v332, %v838
      %v861 = vmul.f32 %v333, %v838
      %v862 = vmul.f32 %v490, %v838
      %v863 = vmul.f32 %v334, %v838
      %v864 = vmul.f32 %v335, %v838
      %v865 = vmul.f32 %v491, %v838
      %v866 = vmul.f32 %v336, %v838
      %v867 = vmul.f32 %v337, %v838
      %v868 = vmul.f32 %v492, %v838
      %v869 = vmul.f32 %v338, %v838
      %v870 = vmul.f32 %v339, %v838
      %v871 = vmul.f32 %v493, %v838
      %v872 = vmul.f32 %v340, %v838
      %v873 = vmul.f32 %v341, %v838
      %v874 = vmul.f32 %v494, %v838
      %v875 = vmul.f32 %v342, %v838
      %v876 = vmul.f32 %v343, %v838
      %v877 = vmul.f32 %v495, %v838
      %v878 = vmul.f32 %v344, %v838
      %v879 = vmul.f32 %v345, %v838
      %v880 = vmul.f32 %v496, %v838
      %v881 = vmul.f32 %v346, %v838
      %v882 = vmul.f32 %v347, %v838
      %v883 = vmul.f32 %v497, %v838
      %v884 = vmul.f32 %v348, %v838
      %v885 = vmul.f32 %v349, %v838
      %v886 = vmul.f32 %v498, %v838
      %v887 = vpack.c.bf16 %v839, %v839
      %v888 = vpack.c.bf16 %v840, %v840
      %v889 = vpack.c.bf16 %v841, %v841
      %v890 = vpack.c.bf16 %v842, %v842
      %v891 = vpack.c.bf16 %v843, %v843
      %v892 = vpack.c.bf16 %v844, %v844
      %v893 = vpack.c.bf16 %v845, %v845
      %v894 = vpack.c.bf16 %v846, %v846
      %v895 = vpack.c.bf16 %v847, %v847
      %v896 = vpack.c.bf16 %v848, %v848
      %v897 = vpack.c.bf16 %v849, %v849
      %v898 = vpack.c.bf16 %v850, %v850
      %v899 = vpack.c.bf16 %v851, %v851
      %v900 = vpack.c.bf16 %v852, %v852
      %v901 = vpack.c.bf16 %v853, %v853
      %v902 = vpack.c.bf16 %v854, %v854
      %v903 = vpack.c.bf16 %v855, %v855
      %v904 = vpack.c.bf16 %v856, %v856
      %v905 = vpack.c.bf16 %v857, %v857
      %v906 = vpack.c.bf16 %v858, %v858
      %v907 = vpack.c.bf16 %v859, %v859
      %v908 = vpack.c.bf16 %v860, %v860
      %v909 = vpack.c.bf16 %v861, %v861
      %v910 = vpack.c.bf16 %v862, %v862
      %v911 = vpack.c.bf16 %v863, %v863
      %v912 = vpack.c.bf16 %v864, %v864
      %v913 = vpack.c.bf16 %v865, %v865
      %v914 = vpack.c.bf16 %v866, %v866
      %v915 = vpack.c.bf16 %v867, %v867
      %v916 = vpack.c.bf16 %v868, %v868
      %v917 = vpack.c.bf16 %v869, %v869
      %v918 = vpack.c.bf16 %v870, %v870
      %v919 = vpack.c.bf16 %v871, %v871
      %v920 = vpack.c.bf16 %v872, %v872
      %v921 = vpack.c.bf16 %v873, %v873
      %v922 = vpack.c.bf16 %v874, %v874
      %v923 = vpack.c.bf16 %v875, %v875
      %v924 = vpack.c.bf16 %v876, %v876
      %v925 = vpack.c.bf16 %v877, %v877
      %v926 = vpack.c.bf16 %v878, %v878
      %v927 = vpack.c.bf16 %v879, %v879
      %v928 = vpack.c.bf16 %v880, %v880
      %v929 = vpack.c.bf16 %v881, %v881
      %v930 = vpack.c.bf16 %v882, %v882
      %v931 = vpack.c.bf16 %v883, %v883
      %v932 = vpack.c.bf16 %v884, %v884
      %v933 = vpack.c.bf16 %v885, %v885
      %v934 = vpack.c.bf16 %v886, %v886
      %v935 = vunpack.c.l.bf16 %v887
      %v936 = vunpack.c.l.bf16 %v888
      %v937 = vunpack.c.l.bf16 %v889
      %v938 = vunpack.c.l.bf16 %v890
      %v939 = vunpack.c.l.bf16 %v891
      %v940 = vunpack.c.l.bf16 %v892
      %v941 = vunpack.c.l.bf16 %v893
      %v942 = vunpack.c.l.bf16 %v894
      %v943 = vunpack.c.l.bf16 %v895
      %v944 = vunpack.c.l.bf16 %v896
      %v945 = vunpack.c.l.bf16 %v897
      %v946 = vunpack.c.l.bf16 %v898
      %v947 = vunpack.c.l.bf16 %v899
      %v948 = vunpack.c.l.bf16 %v900
      %v949 = vunpack.c.l.bf16 %v901
      %v950 = vunpack.c.l.bf16 %v902
      %v951 = vunpack.c.l.bf16 %v903
      %v952 = vunpack.c.l.bf16 %v904
      %v953 = vunpack.c.l.bf16 %v905
      %v954 = vunpack.c.l.bf16 %v906
      %v955 = vunpack.c.l.bf16 %v907
      %v956 = vunpack.c.l.bf16 %v908
      %v957 = vunpack.c.l.bf16 %v909
      %v958 = vunpack.c.l.bf16 %v910
      %v959 = vunpack.c.l.bf16 %v911
      %v960 = vunpack.c.l.bf16 %v912
      %v961 = vunpack.c.l.bf16 %v913
      %v962 = vunpack.c.l.bf16 %v914
      %v963 = vunpack.c.l.bf16 %v915
      %v964 = vunpack.c.l.bf16 %v916
      %v965 = vunpack.c.l.bf16 %v917
      %v966 = vunpack.c.l.bf16 %v918
      %v967 = vunpack.c.l.bf16 %v919
      %v968 = vunpack.c.l.bf16 %v920
      %v969 = vunpack.c.l.bf16 %v921
      %v970 = vunpack.c.l.bf16 %v922
      %v971 = vunpack.c.l.bf16 %v923
      %v972 = vunpack.c.l.bf16 %v924
      %v973 = vunpack.c.l.bf16 %v925
      %v974 = vunpack.c.l.bf16 %v926
      %v975 = vunpack.c.l.bf16 %v927
      %v976 = vunpack.c.l.bf16 %v928
      %v977 = vunpack.c.l.bf16 %v929
      %v978 = vunpack.c.l.bf16 %v930
      %v979 = vunpack.c.l.bf16 %v931
      %v980 = vunpack.c.l.bf16 %v932
      %v981 = vunpack.c.l.bf16 %v933
      %v982 = vunpack.c.l.bf16 %v934
      %vm1031 = vcmask 1045504
      %v1032 = vrot.slane %v935, 2
      %v1033 = vrot.slane %v936, 2
      %v1034 = vsel %vm1031, %v1032, %v1033
      %v1035 = vrot.slane %v937, 2
      %v1036 = vsel %vm1031, %v1033, %v1035
      %v1037 = vrot.slane %v938, 2
      %v1038 = vrot.slane %v939, 2
      %v1039 = vsel %vm1031, %v1037, %v1038
      %v1040 = vrot.slane %v940, 2
      %v1041 = vsel %vm1031, %v1038, %v1040
      %v1042 = vrot.slane %v941, 2
      %v1043 = vrot.slane %v942, 2
      %v1044 = vsel %vm1031, %v1042, %v1043
      %v1045 = vrot.slane %v943, 2
      %v1046 = vsel %vm1031, %v1043, %v1045
      %v1047 = vrot.slane %v944, 2
      %v1048 = vrot.slane %v945, 2
      %v1049 = vsel %vm1031, %v1047, %v1048
      %v1050 = vrot.slane %v946, 2
      %v1051 = vsel %vm1031, %v1048, %v1050
      %v1052 = vrot.slane %v947, 2
      %v1053 = vrot.slane %v948, 2
      %v1054 = vsel %vm1031, %v1052, %v1053
      %v1055 = vrot.slane %v949, 2
      %v1056 = vsel %vm1031, %v1053, %v1055
      %v1057 = vrot.slane %v950, 2
      %v1058 = vrot.slane %v951, 2
      %v1059 = vsel %vm1031, %v1057, %v1058
      %v1060 = vrot.slane %v952, 2
      %v1061 = vsel %vm1031, %v1058, %v1060
      %v1062 = vrot.slane %v953, 2
      %v1063 = vrot.slane %v954, 2
      %v1064 = vsel %vm1031, %v1062, %v1063
      %v1065 = vrot.slane %v955, 2
      %v1066 = vsel %vm1031, %v1063, %v1065
      %v1067 = vrot.slane %v956, 2
      %v1068 = vrot.slane %v957, 2
      %v1069 = vsel %vm1031, %v1067, %v1068
      %v1070 = vrot.slane %v958, 2
      %v1071 = vsel %vm1031, %v1068, %v1070
      %v1072 = vrot.slane %v959, 2
      %v1073 = vrot.slane %v960, 2
      %v1074 = vsel %vm1031, %v1072, %v1073
      %v1075 = vrot.slane %v961, 2
      %v1076 = vsel %vm1031, %v1073, %v1075
      %v1077 = vrot.slane %v962, 2
      %v1078 = vrot.slane %v963, 2
      %v1079 = vsel %vm1031, %v1077, %v1078
      %v1080 = vrot.slane %v964, 2
      %v1081 = vsel %vm1031, %v1078, %v1080
      %v1082 = vrot.slane %v965, 2
      %v1083 = vrot.slane %v966, 2
      %v1084 = vsel %vm1031, %v1082, %v1083
      %v1085 = vrot.slane %v967, 2
      %v1086 = vsel %vm1031, %v1083, %v1085
      %v1087 = vrot.slane %v968, 2
      %v1088 = vrot.slane %v969, 2
      %v1089 = vsel %vm1031, %v1087, %v1088
      %v1090 = vrot.slane %v970, 2
      %v1091 = vsel %vm1031, %v1088, %v1090
      %v1092 = vrot.slane %v971, 2
      %v1093 = vrot.slane %v972, 2
      %v1094 = vsel %vm1031, %v1092, %v1093
      %v1095 = vrot.slane %v973, 2
      %v1096 = vsel %vm1031, %v1093, %v1095
      %v1097 = vrot.slane %v974, 2
      %v1098 = vrot.slane %v975, 2
      %v1099 = vsel %vm1031, %v1097, %v1098
      %v1100 = vrot.slane %v976, 2
      %v1101 = vsel %vm1031, %v1098, %v1100
      %v1102 = vrot.slane %v977, 2
      %v1103 = vrot.slane %v978, 2
      %v1104 = vsel %vm1031, %v1102, %v1103
      %v1105 = vrot.slane %v979, 2
      %v1106 = vsel %vm1031, %v1103, %v1105
      %v1107 = vrot.slane %v980, 2
      %v1108 = vrot.slane %v981, 2
      %v1109 = vsel %vm1031, %v1107, %v1108
      %v1110 = vrot.slane %v982, 2
      %v1111 = vsel %vm1031, %v1108, %v1110
      %v1144 = vadd.f32 %v805, %v1034
      %v1145 = vadd.f32 %v806, %v1036
      %v1146 = vadd.f32 %v807, %v1039
      %v1147 = vadd.f32 %v808, %v1041
      %v1148 = vadd.f32 %v809, %v1044
      %v1149 = vadd.f32 %v810, %v1046
      %v1150 = vadd.f32 %v811, %v1049
      %v1151 = vadd.f32 %v812, %v1051
      %v1152 = vadd.f32 %v813, %v1054
      %v1153 = vadd.f32 %v814, %v1056
      %v1154 = vadd.f32 %v815, %v1059
      %v1155 = vadd.f32 %v816, %v1061
      %v1156 = vadd.f32 %v817, %v1064
      %v1157 = vadd.f32 %v818, %v1066
      %v1158 = vadd.f32 %v819, %v1069
      %v1159 = vadd.f32 %v820, %v1071
      %v1160 = vadd.f32 %v821, %v1074
      %v1161 = vadd.f32 %v822, %v1076
      %v1162 = vadd.f32 %v823, %v1079
      %v1163 = vadd.f32 %v824, %v1081
      %v1164 = vadd.f32 %v825, %v1084
      %v1165 = vadd.f32 %v826, %v1086
      %v1166 = vadd.f32 %v827, %v1089
      %v1167 = vadd.f32 %v828, %v1091
      %v1168 = vadd.f32 %v829, %v1094
      %v1169 = vadd.f32 %v830, %v1096
      %v1170 = vadd.f32 %v831, %v1099
      %v1171 = vadd.f32 %v832, %v1101
      %v1172 = vadd.f32 %v833, %v1104
      %v1173 = vadd.f32 %v834, %v1106
      %v1174 = vadd.f32 %v835, %v1109
      %v1175 = vadd.f32 %v836, %v1111
      %v1176 = vperm.slane %v480, 1
      %v1177 = vunpack.c.l.bf16 %v306
      %v1178 = vunpack.c.l.bf16 %v307
      %v1179 = vunpack.c.l.bf16 %v1176
      %v1180 = vmul.f32 %v320, %v1179
      %v1181 = vmul.f32 %v321, %v1179
      %v1182 = vmul.f32 %v322, %v1179
      %v1183 = vmul.f32 %v323, %v1179
      %v1184 = vmul.f32 %v324, %v1179
      %v1185 = vmul.f32 %v325, %v1179
      %v1186 = vmul.f32 %v326, %v1179
      %v1187 = vmul.f32 %v327, %v1179
      %v1188 = vmul.f32 %v328, %v1179
      %v1189 = vmul.f32 %v329, %v1179
      %v1190 = vmul.f32 %v330, %v1179
      %v1191 = vmul.f32 %v331, %v1179
      %v1192 = vmul.f32 %v332, %v1179
      %v1193 = vmul.f32 %v333, %v1179
      %v1194 = vmul.f32 %v334, %v1179
      %v1195 = vmul.f32 %v335, %v1179
      %v1196 = vmul.f32 %v336, %v1179
      %v1197 = vmul.f32 %v337, %v1179
      %v1198 = vmul.f32 %v338, %v1179
      %v1199 = vmul.f32 %v339, %v1179
      %v1200 = vmul.f32 %v340, %v1179
      %v1201 = vmul.f32 %v341, %v1179
      %v1202 = vmul.f32 %v342, %v1179
      %v1203 = vmul.f32 %v343, %v1179
      %v1204 = vmul.f32 %v344, %v1179
      %v1205 = vmul.f32 %v345, %v1179
      %v1206 = vmul.f32 %v346, %v1179
      %v1207 = vmul.f32 %v347, %v1179
      %v1208 = vmul.f32 %v348, %v1179
      %v1209 = vmul.f32 %v349, %v1179
      %v1210 = vmul.f32 %v1177, %v1179
      %v1211 = vmul.f32 %v1178, %v1179
      %v1212 = vpack.c.bf16 %v1180, %v1180
      %v1213 = vpack.c.bf16 %v1181, %v1181
      %v1214 = vpack.c.bf16 %v1182, %v1182
      %v1215 = vpack.c.bf16 %v1183, %v1183
      %v1216 = vpack.c.bf16 %v1184, %v1184
      %v1217 = vpack.c.bf16 %v1185, %v1185
      %v1218 = vpack.c.bf16 %v1186, %v1186
      %v1219 = vpack.c.bf16 %v1187, %v1187
      %v1220 = vpack.c.bf16 %v1188, %v1188
      %v1221 = vpack.c.bf16 %v1189, %v1189
      %v1222 = vpack.c.bf16 %v1190, %v1190
      %v1223 = vpack.c.bf16 %v1191, %v1191
      %v1224 = vpack.c.bf16 %v1192, %v1192
      %v1225 = vpack.c.bf16 %v1193, %v1193
      %v1226 = vpack.c.bf16 %v1194, %v1194
      %v1227 = vpack.c.bf16 %v1195, %v1195
      %v1228 = vpack.c.bf16 %v1196, %v1196
      %v1229 = vpack.c.bf16 %v1197, %v1197
      %v1230 = vpack.c.bf16 %v1198, %v1198
      %v1231 = vpack.c.bf16 %v1199, %v1199
      %v1232 = vpack.c.bf16 %v1200, %v1200
      %v1233 = vpack.c.bf16 %v1201, %v1201
      %v1234 = vpack.c.bf16 %v1202, %v1202
      %v1235 = vpack.c.bf16 %v1203, %v1203
      %v1236 = vpack.c.bf16 %v1204, %v1204
      %v1237 = vpack.c.bf16 %v1205, %v1205
      %v1238 = vpack.c.bf16 %v1206, %v1206
      %v1239 = vpack.c.bf16 %v1207, %v1207
      %v1240 = vpack.c.bf16 %v1208, %v1208
      %v1241 = vpack.c.bf16 %v1209, %v1209
      %v1242 = vpack.c.bf16 %v1210, %v1210
      %v1243 = vpack.c.bf16 %v1211, %v1211
      %v1244 = vunpack.c.l.bf16 %v1212
      %v1245 = vunpack.c.l.bf16 %v1213
      %v1246 = vunpack.c.l.bf16 %v1214
      %v1247 = vunpack.c.l.bf16 %v1215
      %v1248 = vunpack.c.l.bf16 %v1216
      %v1249 = vunpack.c.l.bf16 %v1217
      %v1250 = vunpack.c.l.bf16 %v1218
      %v1251 = vunpack.c.l.bf16 %v1219
      %v1252 = vunpack.c.l.bf16 %v1220
      %v1253 = vunpack.c.l.bf16 %v1221
      %v1254 = vunpack.c.l.bf16 %v1222
      %v1255 = vunpack.c.l.bf16 %v1223
      %v1256 = vunpack.c.l.bf16 %v1224
      %v1257 = vunpack.c.l.bf16 %v1225
      %v1258 = vunpack.c.l.bf16 %v1226
      %v1259 = vunpack.c.l.bf16 %v1227
      %v1260 = vunpack.c.l.bf16 %v1228
      %v1261 = vunpack.c.l.bf16 %v1229
      %v1262 = vunpack.c.l.bf16 %v1230
      %v1263 = vunpack.c.l.bf16 %v1231
      %v1264 = vunpack.c.l.bf16 %v1232
      %v1265 = vunpack.c.l.bf16 %v1233
      %v1266 = vunpack.c.l.bf16 %v1234
      %v1267 = vunpack.c.l.bf16 %v1235
      %v1268 = vunpack.c.l.bf16 %v1236
      %v1269 = vunpack.c.l.bf16 %v1237
      %v1270 = vunpack.c.l.bf16 %v1238
      %v1271 = vunpack.c.l.bf16 %v1239
      %v1272 = vunpack.c.l.bf16 %v1240
      %v1273 = vunpack.c.l.bf16 %v1241
      %v1274 = vunpack.c.l.bf16 %v1242
      %v1275 = vunpack.c.l.bf16 %v1243
      %v1276 = vadd.f32 %v1144, %v1244
      %v1277 = vadd.f32 %v1145, %v1245
      %v1278 = vadd.f32 %v1146, %v1246
      %v1279 = vadd.f32 %v1147, %v1247
      %v1280 = vadd.f32 %v1148, %v1248
      %v1281 = vadd.f32 %v1149, %v1249
      %v1282 = vadd.f32 %v1150, %v1250
      %v1283 = vadd.f32 %v1151, %v1251
      %v1284 = vadd.f32 %v1152, %v1252
      %v1285 = vadd.f32 %v1153, %v1253
      %v1286 = vadd.f32 %v1154, %v1254
      %v1287 = vadd.f32 %v1155, %v1255
      %v1288 = vadd.f32 %v1156, %v1256
      %v1289 = vadd.f32 %v1157, %v1257
      %v1290 = vadd.f32 %v1158, %v1258
      %v1291 = vadd.f32 %v1159, %v1259
      %v1292 = vadd.f32 %v1160, %v1260
      %v1293 = vadd.f32 %v1161, %v1261
      %v1294 = vadd.f32 %v1162, %v1262
      %v1295 = vadd.f32 %v1163, %v1263
      %v1296 = vadd.f32 %v1164, %v1264
      %v1297 = vadd.f32 %v1165, %v1265
      %v1298 = vadd.f32 %v1166, %v1266
      %v1299 = vadd.f32 %v1167, %v1267
      %v1300 = vadd.f32 %v1168, %v1268
      %v1301 = vadd.f32 %v1169, %v1269
      %v1302 = vadd.f32 %v1170, %v1270
      %v1303 = vadd.f32 %v1171, %v1271
      %v1304 = vadd.f32 %v1172, %v1272
      %v1305 = vadd.f32 %v1173, %v1273
      %v1306 = vadd.f32 %v1174, %v1274
      %v1307 = vadd.f32 %v1175, %v1275
      %v1308 = vperm.slane %v315, 2
      %v1309 = vunpack.c.l.bf16 %v308
      %v1310 = vunpack.c.l.bf16 %v1308
      %v1311 = vmul.f32 %v320, %v1310
      %v1312 = vmul.f32 %v321, %v1310
      %v1313 = vmul.f32 %v484, %v1310
      %v1314 = vmul.f32 %v322, %v1310
      %v1315 = vmul.f32 %v323, %v1310
      %v1316 = vmul.f32 %v485, %v1310
      %v1317 = vmul.f32 %v324, %v1310
      %v1318 = vmul.f32 %v325, %v1310
      %v1319 = vmul.f32 %v486, %v1310
      %v1320 = vmul.f32 %v326, %v1310
      %v1321 = vmul.f32 %v327, %v1310
      %v1322 = vmul.f32 %v487, %v1310
      %v1323 = vmul.f32 %v328, %v1310
      %v1324 = vmul.f32 %v329, %v1310
      %v1325 = vmul.f32 %v488, %v1310
      %v1326 = vmul.f32 %v330, %v1310
      %v1327 = vmul.f32 %v331, %v1310
      %v1328 = vmul.f32 %v489, %v1310
      %v1329 = vmul.f32 %v332, %v1310
      %v1330 = vmul.f32 %v333, %v1310
      %v1331 = vmul.f32 %v490, %v1310
      %v1332 = vmul.f32 %v334, %v1310
      %v1333 = vmul.f32 %v335, %v1310
      %v1334 = vmul.f32 %v491, %v1310
      %v1335 = vmul.f32 %v336, %v1310
      %v1336 = vmul.f32 %v337, %v1310
      %v1337 = vmul.f32 %v492, %v1310
      %v1338 = vmul.f32 %v338, %v1310
      %v1339 = vmul.f32 %v339, %v1310
      %v1340 = vmul.f32 %v493, %v1310
      %v1341 = vmul.f32 %v340, %v1310
      %v1342 = vmul.f32 %v341, %v1310
      %v1343 = vmul.f32 %v494, %v1310
      %v1344 = vmul.f32 %v342, %v1310
      %v1345 = vmul.f32 %v343, %v1310
      %v1346 = vmul.f32 %v495, %v1310
      %v1347 = vmul.f32 %v344, %v1310
      %v1348 = vmul.f32 %v345, %v1310
      %v1349 = vmul.f32 %v496, %v1310
      %v1350 = vmul.f32 %v346, %v1310
      %v1351 = vmul.f32 %v347, %v1310
      %v1352 = vmul.f32 %v497, %v1310
      %v1353 = vmul.f32 %v348, %v1310
      %v1354 = vmul.f32 %v349, %v1310
      %v1355 = vmul.f32 %v498, %v1310
      %v1356 = vmul.f32 %v1177, %v1310
      %v1357 = vmul.f32 %v1178, %v1310
      %v1358 = vmul.f32 %v1309, %v1310
      %v1359 = vpack.c.bf16 %v1311, %v1311
      %v1360 = vpack.c.bf16 %v1312, %v1312
      %v1361 = vpack.c.bf16 %v1313, %v1313
      %v1362 = vpack.c.bf16 %v1314, %v1314
      %v1363 = vpack.c.bf16 %v1315, %v1315
      %v1364 = vpack.c.bf16 %v1316, %v1316
      %v1365 = vpack.c.bf16 %v1317, %v1317
      %v1366 = vpack.c.bf16 %v1318, %v1318
      %v1367 = vpack.c.bf16 %v1319, %v1319
      %v1368 = vpack.c.bf16 %v1320, %v1320
      %v1369 = vpack.c.bf16 %v1321, %v1321
      %v1370 = vpack.c.bf16 %v1322, %v1322
      %v1371 = vpack.c.bf16 %v1323, %v1323
      %v1372 = vpack.c.bf16 %v1324, %v1324
      %v1373 = vpack.c.bf16 %v1325, %v1325
      %v1374 = vpack.c.bf16 %v1326, %v1326
      %v1375 = vpack.c.bf16 %v1327, %v1327
      %v1376 = vpack.c.bf16 %v1328, %v1328
      %v1377 = vpack.c.bf16 %v1329, %v1329
      %v1378 = vpack.c.bf16 %v1330, %v1330
      %v1379 = vpack.c.bf16 %v1331, %v1331
      %v1380 = vpack.c.bf16 %v1332, %v1332
      %v1381 = vpack.c.bf16 %v1333, %v1333
      %v1382 = vpack.c.bf16 %v1334, %v1334
      %v1383 = vpack.c.bf16 %v1335, %v1335
      %v1384 = vpack.c.bf16 %v1336, %v1336
      %v1385 = vpack.c.bf16 %v1337, %v1337
      %v1386 = vpack.c.bf16 %v1338, %v1338
      %v1387 = vpack.c.bf16 %v1339, %v1339
      %v1388 = vpack.c.bf16 %v1340, %v1340
      %v1389 = vpack.c.bf16 %v1341, %v1341
      %v1390 = vpack.c.bf16 %v1342, %v1342
      %v1391 = vpack.c.bf16 %v1343, %v1343
      %v1392 = vpack.c.bf16 %v1344, %v1344
      %v1393 = vpack.c.bf16 %v1345, %v1345
      %v1394 = vpack.c.bf16 %v1346, %v1346
      %v1395 = vpack.c.bf16 %v1347, %v1347
      %v1396 = vpack.c.bf16 %v1348, %v1348
      %v1397 = vpack.c.bf16 %v1349, %v1349
      %v1398 = vpack.c.bf16 %v1350, %v1350
      %v1399 = vpack.c.bf16 %v1351, %v1351
      %v1400 = vpack.c.bf16 %v1352, %v1352
      %v1401 = vpack.c.bf16 %v1353, %v1353
      %v1402 = vpack.c.bf16 %v1354, %v1354
      %v1403 = vpack.c.bf16 %v1355, %v1355
      %v1404 = vpack.c.bf16 %v1356, %v1356
      %v1405 = vpack.c.bf16 %v1357, %v1357
      %v1406 = vpack.c.bf16 %v1358, %v1358
      %v1407 = vunpack.c.l.bf16 %v1359
      %v1408 = vunpack.c.l.bf16 %v1360
      %v1409 = vunpack.c.l.bf16 %v1361
      %v1410 = vunpack.c.l.bf16 %v1362
      %v1411 = vunpack.c.l.bf16 %v1363
      %v1412 = vunpack.c.l.bf16 %v1364
      %v1413 = vunpack.c.l.bf16 %v1365
      %v1414 = vunpack.c.l.bf16 %v1366
      %v1415 = vunpack.c.l.bf16 %v1367
      %v1416 = vunpack.c.l.bf16 %v1368
      %v1417 = vunpack.c.l.bf16 %v1369
      %v1418 = vunpack.c.l.bf16 %v1370
      %v1419 = vunpack.c.l.bf16 %v1371
      %v1420 = vunpack.c.l.bf16 %v1372
      %v1421 = vunpack.c.l.bf16 %v1373
      %v1422 = vunpack.c.l.bf16 %v1374
      %v1423 = vunpack.c.l.bf16 %v1375
      %v1424 = vunpack.c.l.bf16 %v1376
      %v1425 = vunpack.c.l.bf16 %v1377
      %v1426 = vunpack.c.l.bf16 %v1378
      %v1427 = vunpack.c.l.bf16 %v1379
      %v1428 = vunpack.c.l.bf16 %v1380
      %v1429 = vunpack.c.l.bf16 %v1381
      %v1430 = vunpack.c.l.bf16 %v1382
      %v1431 = vunpack.c.l.bf16 %v1383
      %v1432 = vunpack.c.l.bf16 %v1384
      %v1433 = vunpack.c.l.bf16 %v1385
      %v1434 = vunpack.c.l.bf16 %v1386
      %v1435 = vunpack.c.l.bf16 %v1387
      %v1436 = vunpack.c.l.bf16 %v1388
      %v1437 = vunpack.c.l.bf16 %v1389
      %v1438 = vunpack.c.l.bf16 %v1390
      %v1439 = vunpack.c.l.bf16 %v1391
      %v1440 = vunpack.c.l.bf16 %v1392
      %v1441 = vunpack.c.l.bf16 %v1393
      %v1442 = vunpack.c.l.bf16 %v1394
      %v1443 = vunpack.c.l.bf16 %v1395
      %v1444 = vunpack.c.l.bf16 %v1396
      %v1445 = vunpack.c.l.bf16 %v1397
      %v1446 = vunpack.c.l.bf16 %v1398
      %v1447 = vunpack.c.l.bf16 %v1399
      %v1448 = vunpack.c.l.bf16 %v1400
      %v1449 = vunpack.c.l.bf16 %v1401
      %v1450 = vunpack.c.l.bf16 %v1402
      %v1451 = vunpack.c.l.bf16 %v1403
      %v1452 = vunpack.c.l.bf16 %v1404
      %v1453 = vunpack.c.l.bf16 %v1405
      %v1454 = vunpack.c.l.bf16 %v1406
      %v1503 = vrot.slane %v1407, 1
      %v1504 = vrot.slane %v1408, 1
      %v1505 = vsel %vm692, %v1503, %v1504
      %v1506 = vrot.slane %v1409, 1
      %v1507 = vsel %vm692, %v1504, %v1506
      %v1508 = vrot.slane %v1410, 1
      %v1509 = vrot.slane %v1411, 1
      %v1510 = vsel %vm692, %v1508, %v1509
      %v1511 = vrot.slane %v1412, 1
      %v1512 = vsel %vm692, %v1509, %v1511
      %v1513 = vrot.slane %v1413, 1
      %v1514 = vrot.slane %v1414, 1
      %v1515 = vsel %vm692, %v1513, %v1514
      %v1516 = vrot.slane %v1415, 1
      %v1517 = vsel %vm692, %v1514, %v1516
      %v1518 = vrot.slane %v1416, 1
      %v1519 = vrot.slane %v1417, 1
      %v1520 = vsel %vm692, %v1518, %v1519
      %v1521 = vrot.slane %v1418, 1
      %v1522 = vsel %vm692, %v1519, %v1521
      %v1523 = vrot.slane %v1419, 1
      %v1524 = vrot.slane %v1420, 1
      %v1525 = vsel %vm692, %v1523, %v1524
      %v1526 = vrot.slane %v1421, 1
      %v1527 = vsel %vm692, %v1524, %v1526
      %v1528 = vrot.slane %v1422, 1
      %v1529 = vrot.slane %v1423, 1
      %v1530 = vsel %vm692, %v1528, %v1529
      %v1531 = vrot.slane %v1424, 1
      %v1532 = vsel %vm692, %v1529, %v1531
      %v1533 = vrot.slane %v1425, 1
      %v1534 = vrot.slane %v1426, 1
      %v1535 = vsel %vm692, %v1533, %v1534
      %v1536 = vrot.slane %v1427, 1
      %v1537 = vsel %vm692, %v1534, %v1536
      %v1538 = vrot.slane %v1428, 1
      %v1539 = vrot.slane %v1429, 1
      %v1540 = vsel %vm692, %v1538, %v1539
      %v1541 = vrot.slane %v1430, 1
      %v1542 = vsel %vm692, %v1539, %v1541
      %v1543 = vrot.slane %v1431, 1
      %v1544 = vrot.slane %v1432, 1
      %v1545 = vsel %vm692, %v1543, %v1544
      %v1546 = vrot.slane %v1433, 1
      %v1547 = vsel %vm692, %v1544, %v1546
      %v1548 = vrot.slane %v1434, 1
      %v1549 = vrot.slane %v1435, 1
      %v1550 = vsel %vm692, %v1548, %v1549
      %v1551 = vrot.slane %v1436, 1
      %v1552 = vsel %vm692, %v1549, %v1551
      %v1553 = vrot.slane %v1437, 1
      %v1554 = vrot.slane %v1438, 1
      %v1555 = vsel %vm692, %v1553, %v1554
      %v1556 = vrot.slane %v1439, 1
      %v1557 = vsel %vm692, %v1554, %v1556
      %v1558 = vrot.slane %v1440, 1
      %v1559 = vrot.slane %v1441, 1
      %v1560 = vsel %vm692, %v1558, %v1559
      %v1561 = vrot.slane %v1442, 1
      %v1562 = vsel %vm692, %v1559, %v1561
      %v1563 = vrot.slane %v1443, 1
      %v1564 = vrot.slane %v1444, 1
      %v1565 = vsel %vm692, %v1563, %v1564
      %v1566 = vrot.slane %v1445, 1
      %v1567 = vsel %vm692, %v1564, %v1566
      %v1568 = vrot.slane %v1446, 1
      %v1569 = vrot.slane %v1447, 1
      %v1570 = vsel %vm692, %v1568, %v1569
      %v1571 = vrot.slane %v1448, 1
      %v1572 = vsel %vm692, %v1569, %v1571
      %v1573 = vrot.slane %v1449, 1
      %v1574 = vrot.slane %v1450, 1
      %v1575 = vsel %vm692, %v1573, %v1574
      %v1576 = vrot.slane %v1451, 1
      %v1577 = vsel %vm692, %v1574, %v1576
      %v1578 = vrot.slane %v1452, 1
      %v1579 = vrot.slane %v1453, 1
      %v1580 = vsel %vm692, %v1578, %v1579
      %v1581 = vrot.slane %v1454, 1
      %v1582 = vsel %vm692, %v1579, %v1581
      %v1615 = vadd.f32 %v1276, %v1505
      %v1616 = vadd.f32 %v1277, %v1507
      %v1617 = vadd.f32 %v1278, %v1510
      %v1618 = vadd.f32 %v1279, %v1512
      %v1619 = vadd.f32 %v1280, %v1515
      %v1620 = vadd.f32 %v1281, %v1517
      %v1621 = vadd.f32 %v1282, %v1520
      %v1622 = vadd.f32 %v1283, %v1522
      %v1623 = vadd.f32 %v1284, %v1525
      %v1624 = vadd.f32 %v1285, %v1527
      %v1625 = vadd.f32 %v1286, %v1530
      %v1626 = vadd.f32 %v1287, %v1532
      %v1627 = vadd.f32 %v1288, %v1535
      %v1628 = vadd.f32 %v1289, %v1537
      %v1629 = vadd.f32 %v1290, %v1540
      %v1630 = vadd.f32 %v1291, %v1542
      %v1631 = vadd.f32 %v1292, %v1545
      %v1632 = vadd.f32 %v1293, %v1547
      %v1633 = vadd.f32 %v1294, %v1550
      %v1634 = vadd.f32 %v1295, %v1552
      %v1635 = vadd.f32 %v1296, %v1555
      %v1636 = vadd.f32 %v1297, %v1557
      %v1637 = vadd.f32 %v1298, %v1560
      %v1638 = vadd.f32 %v1299, %v1562
      %v1639 = vadd.f32 %v1300, %v1565
      %v1640 = vadd.f32 %v1301, %v1567
      %v1641 = vadd.f32 %v1302, %v1570
      %v1642 = vadd.f32 %v1303, %v1572
      %v1643 = vadd.f32 %v1304, %v1575
      %v1644 = vadd.f32 %v1305, %v1577
      %v1645 = vadd.f32 %v1306, %v1580
      %v1646 = vadd.f32 %v1307, %v1582
      %v1647 = vperm.slane %v480, 2
      %v1648 = vunpack.c.l.bf16 %v1647
      %v1649 = vmul.f32 %v320, %v1648
      %v1650 = vmul.f32 %v321, %v1648
      %v1651 = vmul.f32 %v484, %v1648
      %v1652 = vmul.f32 %v322, %v1648
      %v1653 = vmul.f32 %v323, %v1648
      %v1654 = vmul.f32 %v485, %v1648
      %v1655 = vmul.f32 %v324, %v1648
      %v1656 = vmul.f32 %v325, %v1648
      %v1657 = vmul.f32 %v486, %v1648
      %v1658 = vmul.f32 %v326, %v1648
      %v1659 = vmul.f32 %v327, %v1648
      %v1660 = vmul.f32 %v487, %v1648
      %v1661 = vmul.f32 %v328, %v1648
      %v1662 = vmul.f32 %v329, %v1648
      %v1663 = vmul.f32 %v488, %v1648
      %v1664 = vmul.f32 %v330, %v1648
      %v1665 = vmul.f32 %v331, %v1648
      %v1666 = vmul.f32 %v489, %v1648
      %v1667 = vmul.f32 %v332, %v1648
      %v1668 = vmul.f32 %v333, %v1648
      %v1669 = vmul.f32 %v490, %v1648
      %v1670 = vmul.f32 %v334, %v1648
      %v1671 = vmul.f32 %v335, %v1648
      %v1672 = vmul.f32 %v491, %v1648
      %v1673 = vmul.f32 %v336, %v1648
      %v1674 = vmul.f32 %v337, %v1648
      %v1675 = vmul.f32 %v492, %v1648
      %v1676 = vmul.f32 %v338, %v1648
      %v1677 = vmul.f32 %v339, %v1648
      %v1678 = vmul.f32 %v493, %v1648
      %v1679 = vmul.f32 %v340, %v1648
      %v1680 = vmul.f32 %v341, %v1648
      %v1681 = vmul.f32 %v494, %v1648
      %v1682 = vmul.f32 %v342, %v1648
      %v1683 = vmul.f32 %v343, %v1648
      %v1684 = vmul.f32 %v495, %v1648
      %v1685 = vmul.f32 %v344, %v1648
      %v1686 = vmul.f32 %v345, %v1648
      %v1687 = vmul.f32 %v496, %v1648
      %v1688 = vmul.f32 %v346, %v1648
      %v1689 = vmul.f32 %v347, %v1648
      %v1690 = vmul.f32 %v497, %v1648
      %v1691 = vmul.f32 %v348, %v1648
      %v1692 = vmul.f32 %v349, %v1648
      %v1693 = vmul.f32 %v498, %v1648
      %v1694 = vmul.f32 %v1177, %v1648
      %v1695 = vmul.f32 %v1178, %v1648
      %v1696 = vmul.f32 %v1309, %v1648
      %v1697 = vpack.c.bf16 %v1649, %v1649
      %v1698 = vpack.c.bf16 %v1650, %v1650
      %v1699 = vpack.c.bf16 %v1651, %v1651
      %v1700 = vpack.c.bf16 %v1652, %v1652
      %v1701 = vpack.c.bf16 %v1653, %v1653
      %v1702 = vpack.c.bf16 %v1654, %v1654
      %v1703 = vpack.c.bf16 %v1655, %v1655
      %v1704 = vpack.c.bf16 %v1656, %v1656
      %v1705 = vpack.c.bf16 %v1657, %v1657
      %v1706 = vpack.c.bf16 %v1658, %v1658
      %v1707 = vpack.c.bf16 %v1659, %v1659
      %v1708 = vpack.c.bf16 %v1660, %v1660
      %v1709 = vpack.c.bf16 %v1661, %v1661
      %v1710 = vpack.c.bf16 %v1662, %v1662
      %v1711 = vpack.c.bf16 %v1663, %v1663
      %v1712 = vpack.c.bf16 %v1664, %v1664
      %v1713 = vpack.c.bf16 %v1665, %v1665
      %v1714 = vpack.c.bf16 %v1666, %v1666
      %v1715 = vpack.c.bf16 %v1667, %v1667
      %v1716 = vpack.c.bf16 %v1668, %v1668
      %v1717 = vpack.c.bf16 %v1669, %v1669
      %v1718 = vpack.c.bf16 %v1670, %v1670
      %v1719 = vpack.c.bf16 %v1671, %v1671
      %v1720 = vpack.c.bf16 %v1672, %v1672
      %v1721 = vpack.c.bf16 %v1673, %v1673
      %v1722 = vpack.c.bf16 %v1674, %v1674
      %v1723 = vpack.c.bf16 %v1675, %v1675
      %v1724 = vpack.c.bf16 %v1676, %v1676
      %v1725 = vpack.c.bf16 %v1677, %v1677
      %v1726 = vpack.c.bf16 %v1678, %v1678
      %v1727 = vpack.c.bf16 %v1679, %v1679
      %v1728 = vpack.c.bf16 %v1680, %v1680
      %v1729 = vpack.c.bf16 %v1681, %v1681
      %v1730 = vpack.c.bf16 %v1682, %v1682
      %v1731 = vpack.c.bf16 %v1683, %v1683
      %v1732 = vpack.c.bf16 %v1684, %v1684
      %v1733 = vpack.c.bf16 %v1685, %v1685
      %v1734 = vpack.c.bf16 %v1686, %v1686
      %v1735 = vpack.c.bf16 %v1687, %v1687
      %v1736 = vpack.c.bf16 %v1688, %v1688
      %v1737 = vpack.c.bf16 %v1689, %v1689
      %v1738 = vpack.c.bf16 %v1690, %v1690
      %v1739 = vpack.c.bf16 %v1691, %v1691
      %v1740 = vpack.c.bf16 %v1692, %v1692
      %v1741 = vpack.c.bf16 %v1693, %v1693
      %v1742 = vpack.c.bf16 %v1694, %v1694
      %v1743 = vpack.c.bf16 %v1695, %v1695
      %v1744 = vpack.c.bf16 %v1696, %v1696
      %v1745 = vunpack.c.l.bf16 %v1697
      %v1746 = vunpack.c.l.bf16 %v1698
      %v1747 = vunpack.c.l.bf16 %v1699
      %v1748 = vunpack.c.l.bf16 %v1700
      %v1749 = vunpack.c.l.bf16 %v1701
      %v1750 = vunpack.c.l.bf16 %v1702
      %v1751 = vunpack.c.l.bf16 %v1703
      %v1752 = vunpack.c.l.bf16 %v1704
      %v1753 = vunpack.c.l.bf16 %v1705
      %v1754 = vunpack.c.l.bf16 %v1706
      %v1755 = vunpack.c.l.bf16 %v1707
      %v1756 = vunpack.c.l.bf16 %v1708
      %v1757 = vunpack.c.l.bf16 %v1709
      %v1758 = vunpack.c.l.bf16 %v1710
      %v1759 = vunpack.c.l.bf16 %v1711
      %v1760 = vunpack.c.l.bf16 %v1712
      %v1761 = vunpack.c.l.bf16 %v1713
      %v1762 = vunpack.c.l.bf16 %v1714
      %v1763 = vunpack.c.l.bf16 %v1715
      %v1764 = vunpack.c.l.bf16 %v1716
      %v1765 = vunpack.c.l.bf16 %v1717
      %v1766 = vunpack.c.l.bf16 %v1718
      %v1767 = vunpack.c.l.bf16 %v1719
      %v1768 = vunpack.c.l.bf16 %v1720
      %v1769 = vunpack.c.l.bf16 %v1721
      %v1770 = vunpack.c.l.bf16 %v1722
      %v1771 = vunpack.c.l.bf16 %v1723
      %v1772 = vunpack.c.l.bf16 %v1724
      %v1773 = vunpack.c.l.bf16 %v1725
      %v1774 = vunpack.c.l.bf16 %v1726
      %v1775 = vunpack.c.l.bf16 %v1727
      %v1776 = vunpack.c.l.bf16 %v1728
      %v1777 = vunpack.c.l.bf16 %v1729
      %v1778 = vunpack.c.l.bf16 %v1730
      %v1779 = vunpack.c.l.bf16 %v1731
      %v1780 = vunpack.c.l.bf16 %v1732
      %v1781 = vunpack.c.l.bf16 %v1733
      %v1782 = vunpack.c.l.bf16 %v1734
      %v1783 = vunpack.c.l.bf16 %v1735
      %v1784 = vunpack.c.l.bf16 %v1736
      %v1785 = vunpack.c.l.bf16 %v1737
      %v1786 = vunpack.c.l.bf16 %v1738
      %v1787 = vunpack.c.l.bf16 %v1739
      %v1788 = vunpack.c.l.bf16 %v1740
      %v1789 = vunpack.c.l.bf16 %v1741
      %v1790 = vunpack.c.l.bf16 %v1742
      %v1791 = vunpack.c.l.bf16 %v1743
      %v1792 = vunpack.c.l.bf16 %v1744
      %v1841 = vrot.slane %v1745, 2
      %v1842 = vrot.slane %v1746, 2
      %v1843 = vsel %vm1031, %v1841, %v1842
      %v1844 = vrot.slane %v1747, 2
      %v1845 = vsel %vm1031, %v1842, %v1844
      %v1846 = vrot.slane %v1748, 2
      %v1847 = vrot.slane %v1749, 2
      %v1848 = vsel %vm1031, %v1846, %v1847
      %v1849 = vrot.slane %v1750, 2
      %v1850 = vsel %vm1031, %v1847, %v1849
      %v1851 = vrot.slane %v1751, 2
      %v1852 = vrot.slane %v1752, 2
      %v1853 = vsel %vm1031, %v1851, %v1852
      %v1854 = vrot.slane %v1753, 2
      %v1855 = vsel %vm1031, %v1852, %v1854
      %v1856 = vrot.slane %v1754, 2
      %v1857 = vrot.slane %v1755, 2
      %v1858 = vsel %vm1031, %v1856, %v1857
      %v1859 = vrot.slane %v1756, 2
      %v1860 = vsel %vm1031, %v1857, %v1859
      %v1861 = vrot.slane %v1757, 2
      %v1862 = vrot.slane %v1758, 2
      %v1863 = vsel %vm1031, %v1861, %v1862
      %v1864 = vrot.slane %v1759, 2
      %v1865 = vsel %vm1031, %v1862, %v1864
      %v1866 = vrot.slane %v1760, 2
      %v1867 = vrot.slane %v1761, 2
      %v1868 = vsel %vm1031, %v1866, %v1867
      %v1869 = vrot.slane %v1762, 2
      %v1870 = vsel %vm1031, %v1867, %v1869
      %v1871 = vrot.slane %v1763, 2
      %v1872 = vrot.slane %v1764, 2
      %v1873 = vsel %vm1031, %v1871, %v1872
      %v1874 = vrot.slane %v1765, 2
      %v1875 = vsel %vm1031, %v1872, %v1874
      %v1876 = vrot.slane %v1766, 2
      %v1877 = vrot.slane %v1767, 2
      %v1878 = vsel %vm1031, %v1876, %v1877
      %v1879 = vrot.slane %v1768, 2
      %v1880 = vsel %vm1031, %v1877, %v1879
      %v1881 = vrot.slane %v1769, 2
      %v1882 = vrot.slane %v1770, 2
      %v1883 = vsel %vm1031, %v1881, %v1882
      %v1884 = vrot.slane %v1771, 2
      %v1885 = vsel %vm1031, %v1882, %v1884
      %v1886 = vrot.slane %v1772, 2
      %v1887 = vrot.slane %v1773, 2
      %v1888 = vsel %vm1031, %v1886, %v1887
      %v1889 = vrot.slane %v1774, 2
      %v1890 = vsel %vm1031, %v1887, %v1889
      %v1891 = vrot.slane %v1775, 2
      %v1892 = vrot.slane %v1776, 2
      %v1893 = vsel %vm1031, %v1891, %v1892
      %v1894 = vrot.slane %v1777, 2
      %v1895 = vsel %vm1031, %v1892, %v1894
      %v1896 = vrot.slane %v1778, 2
      %v1897 = vrot.slane %v1779, 2
      %v1898 = vsel %vm1031, %v1896, %v1897
      %v1899 = vrot.slane %v1780, 2
      %v1900 = vsel %vm1031, %v1897, %v1899
      %v1901 = vrot.slane %v1781, 2
      %v1902 = vrot.slane %v1782, 2
      %v1903 = vsel %vm1031, %v1901, %v1902
      %v1904 = vrot.slane %v1783, 2
      %v1905 = vsel %vm1031, %v1902, %v1904
      %v1906 = vrot.slane %v1784, 2
      %v1907 = vrot.slane %v1785, 2
      %v1908 = vsel %vm1031, %v1906, %v1907
      %v1909 = vrot.slane %v1786, 2
      %v1910 = vsel %vm1031, %v1907, %v1909
      %v1911 = vrot.slane %v1787, 2
      %v1912 = vrot.slane %v1788, 2
      %v1913 = vsel %vm1031, %v1911, %v1912
      %v1914 = vrot.slane %v1789, 2
      %v1915 = vsel %vm1031, %v1912, %v1914
      %v1916 = vrot.slane %v1790, 2
      %v1917 = vrot.slane %v1791, 2
      %v1918 = vsel %vm1031, %v1916, %v1917
      %v1919 = vrot.slane %v1792, 2
      %v1920 = vsel %vm1031, %v1917, %v1919
      %v1953 = vadd.f32 %v1615, %v1843
      %v1954 = vadd.f32 %v1616, %v1845
      %v1955 = vadd.f32 %v1617, %v1848
      %v1956 = vadd.f32 %v1618, %v1850
      %v1957 = vadd.f32 %v1619, %v1853
      %v1958 = vadd.f32 %v1620, %v1855
      %v1959 = vadd.f32 %v1621, %v1858
      %v1960 = vadd.f32 %v1622, %v1860
      %v1961 = vadd.f32 %v1623, %v1863
      %v1962 = vadd.f32 %v1624, %v1865
      %v1963 = vadd.f32 %v1625, %v1868
      %v1964 = vadd.f32 %v1626, %v1870
      %v1965 = vadd.f32 %v1627, %v1873
      %v1966 = vadd.f32 %v1628, %v1875
      %v1967 = vadd.f32 %v1629, %v1878
      %v1968 = vadd.f32 %v1630, %v1880
      %v1969 = vadd.f32 %v1631, %v1883
      %v1970 = vadd.f32 %v1632, %v1885
      %v1971 = vadd.f32 %v1633, %v1888
      %v1972 = vadd.f32 %v1634, %v1890
      %v1973 = vadd.f32 %v1635, %v1893
      %v1974 = vadd.f32 %v1636, %v1895
      %v1975 = vadd.f32 %v1637, %v1898
      %v1976 = vadd.f32 %v1638, %v1900
      %v1977 = vadd.f32 %v1639, %v1903
      %v1978 = vadd.f32 %v1640, %v1905
      %v1979 = vadd.f32 %v1641, %v1908
      %v1980 = vadd.f32 %v1642, %v1910
      %v1981 = vadd.f32 %v1643, %v1913
      %v1982 = vadd.f32 %v1644, %v1915
      %v1983 = vadd.f32 %v1645, %v1918
      %v1984 = vadd.f32 %v1646, %v1920
      %v1985 = vperm.slane %v315, 3
      %v1986 = vunpack.c.l.bf16 %v309
      %v1987 = vunpack.c.l.bf16 %v310
      %v1988 = vunpack.c.l.bf16 %v1985
      %v1989 = vmul.f32 %v322, %v1988
      %v1990 = vmul.f32 %v323, %v1988
      %v1991 = vmul.f32 %v324, %v1988
      %v1992 = vmul.f32 %v325, %v1988
      %v1993 = vmul.f32 %v326, %v1988
      %v1994 = vmul.f32 %v327, %v1988
      %v1995 = vmul.f32 %v328, %v1988
      %v1996 = vmul.f32 %v329, %v1988
      %v1997 = vmul.f32 %v330, %v1988
      %v1998 = vmul.f32 %v331, %v1988
      %v1999 = vmul.f32 %v332, %v1988
      %v2000 = vmul.f32 %v333, %v1988
      %v2001 = vmul.f32 %v334, %v1988
      %v2002 = vmul.f32 %v335, %v1988
      %v2003 = vmul.f32 %v336, %v1988
      %v2004 = vmul.f32 %v337, %v1988
      %v2005 = vmul.f32 %v338, %v1988
      %v2006 = vmul.f32 %v339, %v1988
      %v2007 = vmul.f32 %v340, %v1988
      %v2008 = vmul.f32 %v341, %v1988
      %v2009 = vmul.f32 %v342, %v1988
      %v2010 = vmul.f32 %v343, %v1988
      %v2011 = vmul.f32 %v344, %v1988
      %v2012 = vmul.f32 %v345, %v1988
      %v2013 = vmul.f32 %v346, %v1988
      %v2014 = vmul.f32 %v347, %v1988
      %v2015 = vmul.f32 %v348, %v1988
      %v2016 = vmul.f32 %v349, %v1988
      %v2017 = vmul.f32 %v1177, %v1988
      %v2018 = vmul.f32 %v1178, %v1988
      %v2019 = vmul.f32 %v1986, %v1988
      %v2020 = vmul.f32 %v1987, %v1988
      %v2021 = vpack.c.bf16 %v1989, %v1989
      %v2022 = vpack.c.bf16 %v1990, %v1990
      %v2023 = vpack.c.bf16 %v1991, %v1991
      %v2024 = vpack.c.bf16 %v1992, %v1992
      %v2025 = vpack.c.bf16 %v1993, %v1993
      %v2026 = vpack.c.bf16 %v1994, %v1994
      %v2027 = vpack.c.bf16 %v1995, %v1995
      %v2028 = vpack.c.bf16 %v1996, %v1996
      %v2029 = vpack.c.bf16 %v1997, %v1997
      %v2030 = vpack.c.bf16 %v1998, %v1998
      %v2031 = vpack.c.bf16 %v1999, %v1999
      %v2032 = vpack.c.bf16 %v2000, %v2000
      %v2033 = vpack.c.bf16 %v2001, %v2001
      %v2034 = vpack.c.bf16 %v2002, %v2002
      %v2035 = vpack.c.bf16 %v2003, %v2003
      %v2036 = vpack.c.bf16 %v2004, %v2004
      %v2037 = vpack.c.bf16 %v2005, %v2005
      %v2038 = vpack.c.bf16 %v2006, %v2006
      %v2039 = vpack.c.bf16 %v2007, %v2007
      %v2040 = vpack.c.bf16 %v2008, %v2008
      %v2041 = vpack.c.bf16 %v2009, %v2009
      %v2042 = vpack.c.bf16 %v2010, %v2010
      %v2043 = vpack.c.bf16 %v2011, %v2011
      %v2044 = vpack.c.bf16 %v2012, %v2012
      %v2045 = vpack.c.bf16 %v2013, %v2013
      %v2046 = vpack.c.bf16 %v2014, %v2014
      %v2047 = vpack.c.bf16 %v2015, %v2015
      %v2048 = vpack.c.bf16 %v2016, %v2016
      %v2049 = vpack.c.bf16 %v2017, %v2017
      %v2050 = vpack.c.bf16 %v2018, %v2018
      %v2051 = vpack.c.bf16 %v2019, %v2019
      %v2052 = vpack.c.bf16 %v2020, %v2020
      %v2053 = vunpack.c.l.bf16 %v2021
      %v2054 = vunpack.c.l.bf16 %v2022
      %v2055 = vunpack.c.l.bf16 %v2023
      %v2056 = vunpack.c.l.bf16 %v2024
      %v2057 = vunpack.c.l.bf16 %v2025
      %v2058 = vunpack.c.l.bf16 %v2026
      %v2059 = vunpack.c.l.bf16 %v2027
      %v2060 = vunpack.c.l.bf16 %v2028
      %v2061 = vunpack.c.l.bf16 %v2029
      %v2062 = vunpack.c.l.bf16 %v2030
      %v2063 = vunpack.c.l.bf16 %v2031
      %v2064 = vunpack.c.l.bf16 %v2032
      %v2065 = vunpack.c.l.bf16 %v2033
      %v2066 = vunpack.c.l.bf16 %v2034
      %v2067 = vunpack.c.l.bf16 %v2035
      %v2068 = vunpack.c.l.bf16 %v2036
      %v2069 = vunpack.c.l.bf16 %v2037
      %v2070 = vunpack.c.l.bf16 %v2038
      %v2071 = vunpack.c.l.bf16 %v2039
      %v2072 = vunpack.c.l.bf16 %v2040
      %v2073 = vunpack.c.l.bf16 %v2041
      %v2074 = vunpack.c.l.bf16 %v2042
      %v2075 = vunpack.c.l.bf16 %v2043
      %v2076 = vunpack.c.l.bf16 %v2044
      %v2077 = vunpack.c.l.bf16 %v2045
      %v2078 = vunpack.c.l.bf16 %v2046
      %v2079 = vunpack.c.l.bf16 %v2047
      %v2080 = vunpack.c.l.bf16 %v2048
      %v2081 = vunpack.c.l.bf16 %v2049
      %v2082 = vunpack.c.l.bf16 %v2050
      %v2083 = vunpack.c.l.bf16 %v2051
      %v2084 = vunpack.c.l.bf16 %v2052
      %v2085 = vadd.f32 %v1953, %v2053
      %v2086 = vadd.f32 %v1954, %v2054
      %v2087 = vadd.f32 %v1955, %v2055
      %v2088 = vadd.f32 %v1956, %v2056
      %v2089 = vadd.f32 %v1957, %v2057
      %v2090 = vadd.f32 %v1958, %v2058
      %v2091 = vadd.f32 %v1959, %v2059
      %v2092 = vadd.f32 %v1960, %v2060
      %v2093 = vadd.f32 %v1961, %v2061
      %v2094 = vadd.f32 %v1962, %v2062
      %v2095 = vadd.f32 %v1963, %v2063
      %v2096 = vadd.f32 %v1964, %v2064
      %v2097 = vadd.f32 %v1965, %v2065
      %v2098 = vadd.f32 %v1966, %v2066
      %v2099 = vadd.f32 %v1967, %v2067
      %v2100 = vadd.f32 %v1968, %v2068
      %v2101 = vadd.f32 %v1969, %v2069
      %v2102 = vadd.f32 %v1970, %v2070
      %v2103 = vadd.f32 %v1971, %v2071
      %v2104 = vadd.f32 %v1972, %v2072
      %v2105 = vadd.f32 %v1973, %v2073
      %v2106 = vadd.f32 %v1974, %v2074
      %v2107 = vadd.f32 %v1975, %v2075
      %v2108 = vadd.f32 %v1976, %v2076
      %v2109 = vadd.f32 %v1977, %v2077
      %v2110 = vadd.f32 %v1978, %v2078
      %v2111 = vadd.f32 %v1979, %v2079
      %v2112 = vadd.f32 %v1980, %v2080
      %v2113 = vadd.f32 %v1981, %v2081
      %v2114 = vadd.f32 %v1982, %v2082
      %v2115 = vadd.f32 %v1983, %v2083
      %v2116 = vadd.f32 %v1984, %v2084
      %v2117 = vperm.slane %v480, 3
      %v2118 = vunpack.c.l.bf16 %v311
      %v2119 = vunpack.c.l.bf16 %v2117
      %v2120 = vmul.f32 %v322, %v2119
      %v2121 = vmul.f32 %v323, %v2119
      %v2122 = vmul.f32 %v485, %v2119
      %v2123 = vmul.f32 %v324, %v2119
      %v2124 = vmul.f32 %v325, %v2119
      %v2125 = vmul.f32 %v486, %v2119
      %v2126 = vmul.f32 %v326, %v2119
      %v2127 = vmul.f32 %v327, %v2119
      %v2128 = vmul.f32 %v487, %v2119
      %v2129 = vmul.f32 %v328, %v2119
      %v2130 = vmul.f32 %v329, %v2119
      %v2131 = vmul.f32 %v488, %v2119
      %v2132 = vmul.f32 %v330, %v2119
      %v2133 = vmul.f32 %v331, %v2119
      %v2134 = vmul.f32 %v489, %v2119
      %v2135 = vmul.f32 %v332, %v2119
      %v2136 = vmul.f32 %v333, %v2119
      %v2137 = vmul.f32 %v490, %v2119
      %v2138 = vmul.f32 %v334, %v2119
      %v2139 = vmul.f32 %v335, %v2119
      %v2140 = vmul.f32 %v491, %v2119
      %v2141 = vmul.f32 %v336, %v2119
      %v2142 = vmul.f32 %v337, %v2119
      %v2143 = vmul.f32 %v492, %v2119
      %v2144 = vmul.f32 %v338, %v2119
      %v2145 = vmul.f32 %v339, %v2119
      %v2146 = vmul.f32 %v493, %v2119
      %v2147 = vmul.f32 %v340, %v2119
      %v2148 = vmul.f32 %v341, %v2119
      %v2149 = vmul.f32 %v494, %v2119
      %v2150 = vmul.f32 %v342, %v2119
      %v2151 = vmul.f32 %v343, %v2119
      %v2152 = vmul.f32 %v495, %v2119
      %v2153 = vmul.f32 %v344, %v2119
      %v2154 = vmul.f32 %v345, %v2119
      %v2155 = vmul.f32 %v496, %v2119
      %v2156 = vmul.f32 %v346, %v2119
      %v2157 = vmul.f32 %v347, %v2119
      %v2158 = vmul.f32 %v497, %v2119
      %v2159 = vmul.f32 %v348, %v2119
      %v2160 = vmul.f32 %v349, %v2119
      %v2161 = vmul.f32 %v498, %v2119
      %v2162 = vmul.f32 %v1177, %v2119
      %v2163 = vmul.f32 %v1178, %v2119
      %v2164 = vmul.f32 %v1309, %v2119
      %v2165 = vmul.f32 %v1986, %v2119
      %v2166 = vmul.f32 %v1987, %v2119
      %v2167 = vmul.f32 %v2118, %v2119
      %v2168 = vpack.c.bf16 %v2120, %v2120
      %v2169 = vpack.c.bf16 %v2121, %v2121
      %v2170 = vpack.c.bf16 %v2122, %v2122
      %v2171 = vpack.c.bf16 %v2123, %v2123
      %v2172 = vpack.c.bf16 %v2124, %v2124
      %v2173 = vpack.c.bf16 %v2125, %v2125
      %v2174 = vpack.c.bf16 %v2126, %v2126
      %v2175 = vpack.c.bf16 %v2127, %v2127
      %v2176 = vpack.c.bf16 %v2128, %v2128
      %v2177 = vpack.c.bf16 %v2129, %v2129
      %v2178 = vpack.c.bf16 %v2130, %v2130
      %v2179 = vpack.c.bf16 %v2131, %v2131
      %v2180 = vpack.c.bf16 %v2132, %v2132
      %v2181 = vpack.c.bf16 %v2133, %v2133
      %v2182 = vpack.c.bf16 %v2134, %v2134
      %v2183 = vpack.c.bf16 %v2135, %v2135
      %v2184 = vpack.c.bf16 %v2136, %v2136
      %v2185 = vpack.c.bf16 %v2137, %v2137
      %v2186 = vpack.c.bf16 %v2138, %v2138
      %v2187 = vpack.c.bf16 %v2139, %v2139
      %v2188 = vpack.c.bf16 %v2140, %v2140
      %v2189 = vpack.c.bf16 %v2141, %v2141
      %v2190 = vpack.c.bf16 %v2142, %v2142
      %v2191 = vpack.c.bf16 %v2143, %v2143
      %v2192 = vpack.c.bf16 %v2144, %v2144
      %v2193 = vpack.c.bf16 %v2145, %v2145
      %v2194 = vpack.c.bf16 %v2146, %v2146
      %v2195 = vpack.c.bf16 %v2147, %v2147
      %v2196 = vpack.c.bf16 %v2148, %v2148
      %v2197 = vpack.c.bf16 %v2149, %v2149
      %v2198 = vpack.c.bf16 %v2150, %v2150
      %v2199 = vpack.c.bf16 %v2151, %v2151
      %v2200 = vpack.c.bf16 %v2152, %v2152
      %v2201 = vpack.c.bf16 %v2153, %v2153
      %v2202 = vpack.c.bf16 %v2154, %v2154
      %v2203 = vpack.c.bf16 %v2155, %v2155
      %v2204 = vpack.c.bf16 %v2156, %v2156
      %v2205 = vpack.c.bf16 %v2157, %v2157
      %v2206 = vpack.c.bf16 %v2158, %v2158
      %v2207 = vpack.c.bf16 %v2159, %v2159
      %v2208 = vpack.c.bf16 %v2160, %v2160
      %v2209 = vpack.c.bf16 %v2161, %v2161
      %v2210 = vpack.c.bf16 %v2162, %v2162
      %v2211 = vpack.c.bf16 %v2163, %v2163
      %v2212 = vpack.c.bf16 %v2164, %v2164
      %v2213 = vpack.c.bf16 %v2165, %v2165
      %v2214 = vpack.c.bf16 %v2166, %v2166
      %v2215 = vpack.c.bf16 %v2167, %v2167
      %v2216 = vunpack.c.l.bf16 %v2168
      %v2217 = vunpack.c.l.bf16 %v2169
      %v2218 = vunpack.c.l.bf16 %v2170
      %v2219 = vunpack.c.l.bf16 %v2171
      %v2220 = vunpack.c.l.bf16 %v2172
      %v2221 = vunpack.c.l.bf16 %v2173
      %v2222 = vunpack.c.l.bf16 %v2174
      %v2223 = vunpack.c.l.bf16 %v2175
      %v2224 = vunpack.c.l.bf16 %v2176
      %v2225 = vunpack.c.l.bf16 %v2177
      %v2226 = vunpack.c.l.bf16 %v2178
      %v2227 = vunpack.c.l.bf16 %v2179
      %v2228 = vunpack.c.l.bf16 %v2180
      %v2229 = vunpack.c.l.bf16 %v2181
      %v2230 = vunpack.c.l.bf16 %v2182
      %v2231 = vunpack.c.l.bf16 %v2183
      %v2232 = vunpack.c.l.bf16 %v2184
      %v2233 = vunpack.c.l.bf16 %v2185
      %v2234 = vunpack.c.l.bf16 %v2186
      %v2235 = vunpack.c.l.bf16 %v2187
      %v2236 = vunpack.c.l.bf16 %v2188
      %v2237 = vunpack.c.l.bf16 %v2189
      %v2238 = vunpack.c.l.bf16 %v2190
      %v2239 = vunpack.c.l.bf16 %v2191
      %v2240 = vunpack.c.l.bf16 %v2192
      %v2241 = vunpack.c.l.bf16 %v2193
      %v2242 = vunpack.c.l.bf16 %v2194
      %v2243 = vunpack.c.l.bf16 %v2195
      %v2244 = vunpack.c.l.bf16 %v2196
      %v2245 = vunpack.c.l.bf16 %v2197
      %v2246 = vunpack.c.l.bf16 %v2198
      %v2247 = vunpack.c.l.bf16 %v2199
      %v2248 = vunpack.c.l.bf16 %v2200
      %v2249 = vunpack.c.l.bf16 %v2201
      %v2250 = vunpack.c.l.bf16 %v2202
      %v2251 = vunpack.c.l.bf16 %v2203
      %v2252 = vunpack.c.l.bf16 %v2204
      %v2253 = vunpack.c.l.bf16 %v2205
      %v2254 = vunpack.c.l.bf16 %v2206
      %v2255 = vunpack.c.l.bf16 %v2207
      %v2256 = vunpack.c.l.bf16 %v2208
      %v2257 = vunpack.c.l.bf16 %v2209
      %v2258 = vunpack.c.l.bf16 %v2210
      %v2259 = vunpack.c.l.bf16 %v2211
      %v2260 = vunpack.c.l.bf16 %v2212
      %v2261 = vunpack.c.l.bf16 %v2213
      %v2262 = vunpack.c.l.bf16 %v2214
      %v2263 = vunpack.c.l.bf16 %v2215
      %v2312 = vrot.slane %v2216, 1
      %v2313 = vrot.slane %v2217, 1
      %v2314 = vsel %vm692, %v2312, %v2313
      %v2315 = vrot.slane %v2218, 1
      %v2316 = vsel %vm692, %v2313, %v2315
      %v2317 = vrot.slane %v2219, 1
      %v2318 = vrot.slane %v2220, 1
      %v2319 = vsel %vm692, %v2317, %v2318
      %v2320 = vrot.slane %v2221, 1
      %v2321 = vsel %vm692, %v2318, %v2320
      %v2322 = vrot.slane %v2222, 1
      %v2323 = vrot.slane %v2223, 1
      %v2324 = vsel %vm692, %v2322, %v2323
      %v2325 = vrot.slane %v2224, 1
      %v2326 = vsel %vm692, %v2323, %v2325
      %v2327 = vrot.slane %v2225, 1
      %v2328 = vrot.slane %v2226, 1
      %v2329 = vsel %vm692, %v2327, %v2328
      %v2330 = vrot.slane %v2227, 1
      %v2331 = vsel %vm692, %v2328, %v2330
      %v2332 = vrot.slane %v2228, 1
      %v2333 = vrot.slane %v2229, 1
      %v2334 = vsel %vm692, %v2332, %v2333
      %v2335 = vrot.slane %v2230, 1
      %v2336 = vsel %vm692, %v2333, %v2335
      %v2337 = vrot.slane %v2231, 1
      %v2338 = vrot.slane %v2232, 1
      %v2339 = vsel %vm692, %v2337, %v2338
      %v2340 = vrot.slane %v2233, 1
      %v2341 = vsel %vm692, %v2338, %v2340
      %v2342 = vrot.slane %v2234, 1
      %v2343 = vrot.slane %v2235, 1
      %v2344 = vsel %vm692, %v2342, %v2343
      %v2345 = vrot.slane %v2236, 1
      %v2346 = vsel %vm692, %v2343, %v2345
      %v2347 = vrot.slane %v2237, 1
      %v2348 = vrot.slane %v2238, 1
      %v2349 = vsel %vm692, %v2347, %v2348
      %v2350 = vrot.slane %v2239, 1
      %v2351 = vsel %vm692, %v2348, %v2350
      %v2352 = vrot.slane %v2240, 1
      %v2353 = vrot.slane %v2241, 1
      %v2354 = vsel %vm692, %v2352, %v2353
      %v2355 = vrot.slane %v2242, 1
      %v2356 = vsel %vm692, %v2353, %v2355
      %v2357 = vrot.slane %v2243, 1
      %v2358 = vrot.slane %v2244, 1
      %v2359 = vsel %vm692, %v2357, %v2358
      %v2360 = vrot.slane %v2245, 1
      %v2361 = vsel %vm692, %v2358, %v2360
      %v2362 = vrot.slane %v2246, 1
      %v2363 = vrot.slane %v2247, 1
      %v2364 = vsel %vm692, %v2362, %v2363
      %v2365 = vrot.slane %v2248, 1
      %v2366 = vsel %vm692, %v2363, %v2365
      %v2367 = vrot.slane %v2249, 1
      %v2368 = vrot.slane %v2250, 1
      %v2369 = vsel %vm692, %v2367, %v2368
      %v2370 = vrot.slane %v2251, 1
      %v2371 = vsel %vm692, %v2368, %v2370
      %v2372 = vrot.slane %v2252, 1
      %v2373 = vrot.slane %v2253, 1
      %v2374 = vsel %vm692, %v2372, %v2373
      %v2375 = vrot.slane %v2254, 1
      %v2376 = vsel %vm692, %v2373, %v2375
      %v2377 = vrot.slane %v2255, 1
      %v2378 = vrot.slane %v2256, 1
      %v2379 = vsel %vm692, %v2377, %v2378
      %v2380 = vrot.slane %v2257, 1
      %v2381 = vsel %vm692, %v2378, %v2380
      %v2382 = vrot.slane %v2258, 1
      %v2383 = vrot.slane %v2259, 1
      %v2384 = vsel %vm692, %v2382, %v2383
      %v2385 = vrot.slane %v2260, 1
      %v2386 = vsel %vm692, %v2383, %v2385
      %v2387 = vrot.slane %v2261, 1
      %v2388 = vrot.slane %v2262, 1
      %v2389 = vsel %vm692, %v2387, %v2388
      %v2390 = vrot.slane %v2263, 1
      %v2391 = vsel %vm692, %v2388, %v2390
      %v2424 = vadd.f32 %v2085, %v2314
      %v2425 = vadd.f32 %v2086, %v2316
      %v2426 = vadd.f32 %v2087, %v2319
      %v2427 = vadd.f32 %v2088, %v2321
      %v2428 = vadd.f32 %v2089, %v2324
      %v2429 = vadd.f32 %v2090, %v2326
      %v2430 = vadd.f32 %v2091, %v2329
      %v2431 = vadd.f32 %v2092, %v2331
      %v2432 = vadd.f32 %v2093, %v2334
      %v2433 = vadd.f32 %v2094, %v2336
      %v2434 = vadd.f32 %v2095, %v2339
      %v2435 = vadd.f32 %v2096, %v2341
      %v2436 = vadd.f32 %v2097, %v2344
      %v2437 = vadd.f32 %v2098, %v2346
      %v2438 = vadd.f32 %v2099, %v2349
      %v2439 = vadd.f32 %v2100, %v2351
      %v2440 = vadd.f32 %v2101, %v2354
      %v2441 = vadd.f32 %v2102, %v2356
      %v2442 = vadd.f32 %v2103, %v2359
      %v2443 = vadd.f32 %v2104, %v2361
      %v2444 = vadd.f32 %v2105, %v2364
      %v2445 = vadd.f32 %v2106, %v2366
      %v2446 = vadd.f32 %v2107, %v2369
      %v2447 = vadd.f32 %v2108, %v2371
      %v2448 = vadd.f32 %v2109, %v2374
      %v2449 = vadd.f32 %v2110, %v2376
      %v2450 = vadd.f32 %v2111, %v2379
      %v2451 = vadd.f32 %v2112, %v2381
      %v2452 = vadd.f32 %v2113, %v2384
      %v2453 = vadd.f32 %v2114, %v2386
      %v2454 = vadd.f32 %v2115, %v2389
      %v2455 = vadd.f32 %v2116, %v2391
      %v2457 = vpack.i.b16 %v313, %v313
      %v2459 = vperm.slane %v2457, 0
      %v2460 = vunpack.c.l.bf16 %v2459
      %v2461 = vmul.f32 %v322, %v2460
      %v2462 = vmul.f32 %v323, %v2460
      %v2463 = vmul.f32 %v485, %v2460
      %v2464 = vmul.f32 %v324, %v2460
      %v2465 = vmul.f32 %v325, %v2460
      %v2466 = vmul.f32 %v486, %v2460
      %v2467 = vmul.f32 %v326, %v2460
      %v2468 = vmul.f32 %v327, %v2460
      %v2469 = vmul.f32 %v487, %v2460
      %v2470 = vmul.f32 %v328, %v2460
      %v2471 = vmul.f32 %v329, %v2460
      %v2472 = vmul.f32 %v488, %v2460
      %v2473 = vmul.f32 %v330, %v2460
      %v2474 = vmul.f32 %v331, %v2460
      %v2475 = vmul.f32 %v489, %v2460
      %v2476 = vmul.f32 %v332, %v2460
      %v2477 = vmul.f32 %v333, %v2460
      %v2478 = vmul.f32 %v490, %v2460
      %v2479 = vmul.f32 %v334, %v2460
      %v2480 = vmul.f32 %v335, %v2460
      %v2481 = vmul.f32 %v491, %v2460
      %v2482 = vmul.f32 %v336, %v2460
      %v2483 = vmul.f32 %v337, %v2460
      %v2484 = vmul.f32 %v492, %v2460
      %v2485 = vmul.f32 %v338, %v2460
      %v2486 = vmul.f32 %v339, %v2460
      %v2487 = vmul.f32 %v493, %v2460
      %v2488 = vmul.f32 %v340, %v2460
      %v2489 = vmul.f32 %v341, %v2460
      %v2490 = vmul.f32 %v494, %v2460
      %v2491 = vmul.f32 %v342, %v2460
      %v2492 = vmul.f32 %v343, %v2460
      %v2493 = vmul.f32 %v495, %v2460
      %v2494 = vmul.f32 %v344, %v2460
      %v2495 = vmul.f32 %v345, %v2460
      %v2496 = vmul.f32 %v496, %v2460
      %v2497 = vmul.f32 %v346, %v2460
      %v2498 = vmul.f32 %v347, %v2460
      %v2499 = vmul.f32 %v497, %v2460
      %v2500 = vmul.f32 %v348, %v2460
      %v2501 = vmul.f32 %v349, %v2460
      %v2502 = vmul.f32 %v498, %v2460
      %v2503 = vmul.f32 %v1177, %v2460
      %v2504 = vmul.f32 %v1178, %v2460
      %v2505 = vmul.f32 %v1309, %v2460
      %v2506 = vmul.f32 %v1986, %v2460
      %v2507 = vmul.f32 %v1987, %v2460
      %v2508 = vmul.f32 %v2118, %v2460
      %v2509 = vpack.c.bf16 %v2461, %v2461
      %v2510 = vpack.c.bf16 %v2462, %v2462
      %v2511 = vpack.c.bf16 %v2463, %v2463
      %v2512 = vpack.c.bf16 %v2464, %v2464
      %v2513 = vpack.c.bf16 %v2465, %v2465
      %v2514 = vpack.c.bf16 %v2466, %v2466
      %v2515 = vpack.c.bf16 %v2467, %v2467
      %v2516 = vpack.c.bf16 %v2468, %v2468
      %v2517 = vpack.c.bf16 %v2469, %v2469
      %v2518 = vpack.c.bf16 %v2470, %v2470
      %v2519 = vpack.c.bf16 %v2471, %v2471
      %v2520 = vpack.c.bf16 %v2472, %v2472
      %v2521 = vpack.c.bf16 %v2473, %v2473
      %v2522 = vpack.c.bf16 %v2474, %v2474
      %v2523 = vpack.c.bf16 %v2475, %v2475
      %v2524 = vpack.c.bf16 %v2476, %v2476
      %v2525 = vpack.c.bf16 %v2477, %v2477
      %v2526 = vpack.c.bf16 %v2478, %v2478
      %v2527 = vpack.c.bf16 %v2479, %v2479
      %v2528 = vpack.c.bf16 %v2480, %v2480
      %v2529 = vpack.c.bf16 %v2481, %v2481
      %v2530 = vpack.c.bf16 %v2482, %v2482
      %v2531 = vpack.c.bf16 %v2483, %v2483
      %v2532 = vpack.c.bf16 %v2484, %v2484
      %v2533 = vpack.c.bf16 %v2485, %v2485
      %v2534 = vpack.c.bf16 %v2486, %v2486
      %v2535 = vpack.c.bf16 %v2487, %v2487
      %v2536 = vpack.c.bf16 %v2488, %v2488
      %v2537 = vpack.c.bf16 %v2489, %v2489
      %v2538 = vpack.c.bf16 %v2490, %v2490
      %v2539 = vpack.c.bf16 %v2491, %v2491
      %v2540 = vpack.c.bf16 %v2492, %v2492
      %v2541 = vpack.c.bf16 %v2493, %v2493
      %v2542 = vpack.c.bf16 %v2494, %v2494
      %v2543 = vpack.c.bf16 %v2495, %v2495
      %v2544 = vpack.c.bf16 %v2496, %v2496
      %v2545 = vpack.c.bf16 %v2497, %v2497
      %v2546 = vpack.c.bf16 %v2498, %v2498
      %v2547 = vpack.c.bf16 %v2499, %v2499
      %v2548 = vpack.c.bf16 %v2500, %v2500
      %v2549 = vpack.c.bf16 %v2501, %v2501
      %v2550 = vpack.c.bf16 %v2502, %v2502
      %v2551 = vpack.c.bf16 %v2503, %v2503
      %v2552 = vpack.c.bf16 %v2504, %v2504
      %v2553 = vpack.c.bf16 %v2505, %v2505
      %v2554 = vpack.c.bf16 %v2506, %v2506
      %v2555 = vpack.c.bf16 %v2507, %v2507
      %v2556 = vpack.c.bf16 %v2508, %v2508
      %v2557 = vunpack.c.l.bf16 %v2509
      %v2558 = vunpack.c.l.bf16 %v2510
      %v2559 = vunpack.c.l.bf16 %v2511
      %v2560 = vunpack.c.l.bf16 %v2512
      %v2561 = vunpack.c.l.bf16 %v2513
      %v2562 = vunpack.c.l.bf16 %v2514
      %v2563 = vunpack.c.l.bf16 %v2515
      %v2564 = vunpack.c.l.bf16 %v2516
      %v2565 = vunpack.c.l.bf16 %v2517
      %v2566 = vunpack.c.l.bf16 %v2518
      %v2567 = vunpack.c.l.bf16 %v2519
      %v2568 = vunpack.c.l.bf16 %v2520
      %v2569 = vunpack.c.l.bf16 %v2521
      %v2570 = vunpack.c.l.bf16 %v2522
      %v2571 = vunpack.c.l.bf16 %v2523
      %v2572 = vunpack.c.l.bf16 %v2524
      %v2573 = vunpack.c.l.bf16 %v2525
      %v2574 = vunpack.c.l.bf16 %v2526
      %v2575 = vunpack.c.l.bf16 %v2527
      %v2576 = vunpack.c.l.bf16 %v2528
      %v2577 = vunpack.c.l.bf16 %v2529
      %v2578 = vunpack.c.l.bf16 %v2530
      %v2579 = vunpack.c.l.bf16 %v2531
      %v2580 = vunpack.c.l.bf16 %v2532
      %v2581 = vunpack.c.l.bf16 %v2533
      %v2582 = vunpack.c.l.bf16 %v2534
      %v2583 = vunpack.c.l.bf16 %v2535
      %v2584 = vunpack.c.l.bf16 %v2536
      %v2585 = vunpack.c.l.bf16 %v2537
      %v2586 = vunpack.c.l.bf16 %v2538
      %v2587 = vunpack.c.l.bf16 %v2539
      %v2588 = vunpack.c.l.bf16 %v2540
      %v2589 = vunpack.c.l.bf16 %v2541
      %v2590 = vunpack.c.l.bf16 %v2542
      %v2591 = vunpack.c.l.bf16 %v2543
      %v2592 = vunpack.c.l.bf16 %v2544
      %v2593 = vunpack.c.l.bf16 %v2545
      %v2594 = vunpack.c.l.bf16 %v2546
      %v2595 = vunpack.c.l.bf16 %v2547
      %v2596 = vunpack.c.l.bf16 %v2548
      %v2597 = vunpack.c.l.bf16 %v2549
      %v2598 = vunpack.c.l.bf16 %v2550
      %v2599 = vunpack.c.l.bf16 %v2551
      %v2600 = vunpack.c.l.bf16 %v2552
      %v2601 = vunpack.c.l.bf16 %v2553
      %v2602 = vunpack.c.l.bf16 %v2554
      %v2603 = vunpack.c.l.bf16 %v2555
      %v2604 = vunpack.c.l.bf16 %v2556
      %v2653 = vrot.slane %v2557, 2
      %v2654 = vrot.slane %v2558, 2
      %v2655 = vsel %vm1031, %v2653, %v2654
      %v2656 = vrot.slane %v2559, 2
      %v2657 = vsel %vm1031, %v2654, %v2656
      %v2658 = vrot.slane %v2560, 2
      %v2659 = vrot.slane %v2561, 2
      %v2660 = vsel %vm1031, %v2658, %v2659
      %v2661 = vrot.slane %v2562, 2
      %v2662 = vsel %vm1031, %v2659, %v2661
      %v2663 = vrot.slane %v2563, 2
      %v2664 = vrot.slane %v2564, 2
      %v2665 = vsel %vm1031, %v2663, %v2664
      %v2666 = vrot.slane %v2565, 2
      %v2667 = vsel %vm1031, %v2664, %v2666
      %v2668 = vrot.slane %v2566, 2
      %v2669 = vrot.slane %v2567, 2
      %v2670 = vsel %vm1031, %v2668, %v2669
      %v2671 = vrot.slane %v2568, 2
      %v2672 = vsel %vm1031, %v2669, %v2671
      %v2673 = vrot.slane %v2569, 2
      %v2674 = vrot.slane %v2570, 2
      %v2675 = vsel %vm1031, %v2673, %v2674
      %v2676 = vrot.slane %v2571, 2
      %v2677 = vsel %vm1031, %v2674, %v2676
      %v2678 = vrot.slane %v2572, 2
      %v2679 = vrot.slane %v2573, 2
      %v2680 = vsel %vm1031, %v2678, %v2679
      %v2681 = vrot.slane %v2574, 2
      %v2682 = vsel %vm1031, %v2679, %v2681
      %v2683 = vrot.slane %v2575, 2
      %v2684 = vrot.slane %v2576, 2
      %v2685 = vsel %vm1031, %v2683, %v2684
      %v2686 = vrot.slane %v2577, 2
      %v2687 = vsel %vm1031, %v2684, %v2686
      %v2688 = vrot.slane %v2578, 2
      %v2689 = vrot.slane %v2579, 2
      %v2690 = vsel %vm1031, %v2688, %v2689
      %v2691 = vrot.slane %v2580, 2
      %v2692 = vsel %vm1031, %v2689, %v2691
      %v2693 = vrot.slane %v2581, 2
      %v2694 = vrot.slane %v2582, 2
      %v2695 = vsel %vm1031, %v2693, %v2694
      %v2696 = vrot.slane %v2583, 2
      %v2697 = vsel %vm1031, %v2694, %v2696
      %v2698 = vrot.slane %v2584, 2
      %v2699 = vrot.slane %v2585, 2
      %v2700 = vsel %vm1031, %v2698, %v2699
      %v2701 = vrot.slane %v2586, 2
      %v2702 = vsel %vm1031, %v2699, %v2701
      %v2703 = vrot.slane %v2587, 2
      %v2704 = vrot.slane %v2588, 2
      %v2705 = vsel %vm1031, %v2703, %v2704
      %v2706 = vrot.slane %v2589, 2
      %v2707 = vsel %vm1031, %v2704, %v2706
      %v2708 = vrot.slane %v2590, 2
      %v2709 = vrot.slane %v2591, 2
      %v2710 = vsel %vm1031, %v2708, %v2709
      %v2711 = vrot.slane %v2592, 2
      %v2712 = vsel %vm1031, %v2709, %v2711
      %v2713 = vrot.slane %v2593, 2
      %v2714 = vrot.slane %v2594, 2
      %v2715 = vsel %vm1031, %v2713, %v2714
      %v2716 = vrot.slane %v2595, 2
      %v2717 = vsel %vm1031, %v2714, %v2716
      %v2718 = vrot.slane %v2596, 2
      %v2719 = vrot.slane %v2597, 2
      %v2720 = vsel %vm1031, %v2718, %v2719
      %v2721 = vrot.slane %v2598, 2
      %v2722 = vsel %vm1031, %v2719, %v2721
      %v2723 = vrot.slane %v2599, 2
      %v2724 = vrot.slane %v2600, 2
      %v2725 = vsel %vm1031, %v2723, %v2724
      %v2726 = vrot.slane %v2601, 2
      %v2727 = vsel %vm1031, %v2724, %v2726
      %v2728 = vrot.slane %v2602, 2
      %v2729 = vrot.slane %v2603, 2
      %v2730 = vsel %vm1031, %v2728, %v2729
      %v2731 = vrot.slane %v2604, 2
      %v2732 = vsel %vm1031, %v2729, %v2731
      %v2765 = vadd.f32 %v2424, %v2655
      %v2766 = vadd.f32 %v2425, %v2657
      %v2767 = vadd.f32 %v2426, %v2660
      %v2768 = vadd.f32 %v2427, %v2662
      %v2769 = vadd.f32 %v2428, %v2665
      %v2770 = vadd.f32 %v2429, %v2667
      %v2771 = vadd.f32 %v2430, %v2670
      %v2772 = vadd.f32 %v2431, %v2672
      %v2773 = vadd.f32 %v2432, %v2675
      %v2774 = vadd.f32 %v2433, %v2677
      %v2775 = vadd.f32 %v2434, %v2680
      %v2776 = vadd.f32 %v2435, %v2682
      %v2777 = vadd.f32 %v2436, %v2685
      %v2778 = vadd.f32 %v2437, %v2687
      %v2779 = vadd.f32 %v2438, %v2690
      %v2780 = vadd.f32 %v2439, %v2692
      %v2781 = vadd.f32 %v2440, %v2695
      %v2782 = vadd.f32 %v2441, %v2697
      %v2783 = vadd.f32 %v2442, %v2700
      %v2784 = vadd.f32 %v2443, %v2702
      %v2785 = vadd.f32 %v2444, %v2705
      %v2786 = vadd.f32 %v2445, %v2707
      %v2787 = vadd.f32 %v2446, %v2710
      %v2788 = vadd.f32 %v2447, %v2712
      %v2789 = vadd.f32 %v2448, %v2715
      %v2790 = vadd.f32 %v2449, %v2717
      %v2791 = vadd.f32 %v2450, %v2720
      %v2792 = vadd.f32 %v2451, %v2722
      %v2793 = vadd.f32 %v2452, %v2725
      %v2794 = vadd.f32 %v2453, %v2727
      %v2795 = vadd.f32 %v2454, %v2730
      %v2796 = vadd.f32 %v2455, %v2732
      %v2797 = vld [vmem:[%s2] sm:$0x1]
      %v2799 = vperm.slane %v2797, 0
      %v2801 = vadd.f32 %v2765, %v2799
      %v2802 = vadd.f32 %v2766, %v2799
      %v2803 = vadd.f32 %v2767, %v2799
      %v2804 = vadd.f32 %v2768, %v2799
      %v2805 = vadd.f32 %v2769, %v2799
      %v2806 = vadd.f32 %v2770, %v2799
      %v2807 = vadd.f32 %v2771, %v2799
      %v2808 = vadd.f32 %v2772, %v2799
      %v2809 = vadd.f32 %v2773, %v2799
      %v2810 = vadd.f32 %v2774, %v2799
      %v2811 = vadd.f32 %v2775, %v2799
      %v2812 = vadd.f32 %v2776, %v2799
      %v2813 = vadd.f32 %v2777, %v2799
      %v2814 = vadd.f32 %v2778, %v2799
      %v2815 = vadd.f32 %v2779, %v2799
      %v2816 = vadd.f32 %v2780, %v2799
      %v2817 = vadd.f32 %v2781, %v2799
      %v2818 = vadd.f32 %v2782, %v2799
      %v2819 = vadd.f32 %v2783, %v2799
      %v2820 = vadd.f32 %v2784, %v2799
      %v2821 = vadd.f32 %v2785, %v2799
      %v2822 = vadd.f32 %v2786, %v2799
      %v2823 = vadd.f32 %v2787, %v2799
      %v2824 = vadd.f32 %v2788, %v2799
      %v2825 = vadd.f32 %v2789, %v2799
      %v2826 = vadd.f32 %v2790, %v2799
      %v2827 = vadd.f32 %v2791, %v2799
      %v2828 = vadd.f32 %v2792, %v2799
      %v2829 = vadd.f32 %v2793, %v2799
      %v2830 = vadd.f32 %v2794, %v2799
      %v2831 = vadd.f32 %v2795, %v2799
      %v2832 = vadd.f32 %v2796, %v2799
      %v2833 = vmax.f32 %v2801, 0.0
      %v2834 = vmax.f32 %v2802, 0.0
      %v2835 = vmax.f32 %v2803, 0.0
      %v2836 = vmax.f32 %v2804, 0.0
      %v2837 = vmax.f32 %v2805, 0.0
      %v2838 = vmax.f32 %v2806, 0.0
      %v2839 = vmax.f32 %v2807, 0.0
      %v2840 = vmax.f32 %v2808, 0.0
      %v2841 = vmax.f32 %v2809, 0.0
      %v2842 = vmax.f32 %v2810, 0.0
      %v2843 = vmax.f32 %v2811, 0.0
      %v2844 = vmax.f32 %v2812, 0.0
      %v2845 = vmax.f32 %v2813, 0.0
      %v2846 = vmax.f32 %v2814, 0.0
      %v2847 = vmax.f32 %v2815, 0.0
      %v2848 = vmax.f32 %v2816, 0.0
      %v2849 = vmax.f32 %v2817, 0.0
      %v2850 = vmax.f32 %v2818, 0.0
      %v2851 = vmax.f32 %v2819, 0.0
      %v2852 = vmax.f32 %v2820, 0.0
      %v2853 = vmax.f32 %v2821, 0.0
      %v2854 = vmax.f32 %v2822, 0.0
      %v2855 = vmax.f32 %v2823, 0.0
      %v2856 = vmax.f32 %v2824, 0.0
      %v2857 = vmax.f32 %v2825, 0.0
      %v2858 = vmax.f32 %v2826, 0.0
      %v2859 = vmax.f32 %v2827, 0.0
      %v2860 = vmax.f32 %v2828, 0.0
      %v2861 = vmax.f32 %v2829, 0.0
      %v2862 = vmax.f32 %v2830, 0.0
      %v2863 = vmax.f32 %v2831, 0.0
      %v2864 = vmax.f32 %v2832, 0.0
      %v2865 = vpack.c.bf16 %v2833, %v2833
      %v2866 = vpack.c.bf16 %v2834, %v2834
      %v2867 = vpack.c.bf16 %v2835, %v2835
      %v2868 = vpack.c.bf16 %v2836, %v2836
      %v2869 = vpack.c.bf16 %v2837, %v2837
      %v2870 = vpack.c.bf16 %v2838, %v2838
      %v2871 = vpack.c.bf16 %v2839, %v2839
      %v2872 = vpack.c.bf16 %v2840, %v2840
      %v2873 = vpack.c.bf16 %v2841, %v2841
      %v2874 = vpack.c.bf16 %v2842, %v2842
      %v2875 = vpack.c.bf16 %v2843, %v2843
      %v2876 = vpack.c.bf16 %v2844, %v2844
      %v2877 = vpack.c.bf16 %v2845, %v2845
      %v2878 = vpack.c.bf16 %v2846, %v2846
      %v2879 = vpack.c.bf16 %v2847, %v2847
      %v2880 = vpack.c.bf16 %v2848, %v2848
      %v2881 = vpack.c.bf16 %v2849, %v2849
      %v2882 = vpack.c.bf16 %v2850, %v2850
      %v2883 = vpack.c.bf16 %v2851, %v2851
      %v2884 = vpack.c.bf16 %v2852, %v2852
      %v2885 = vpack.c.bf16 %v2853, %v2853
      %v2886 = vpack.c.bf16 %v2854, %v2854
      %v2887 = vpack.c.bf16 %v2855, %v2855
      %v2888 = vpack.c.bf16 %v2856, %v2856
      %v2889 = vpack.c.bf16 %v2857, %v2857
      %v2890 = vpack.c.bf16 %v2858, %v2858
      %v2891 = vpack.c.bf16 %v2859, %v2859
      %v2892 = vpack.c.bf16 %v2860, %v2860
      %v2893 = vpack.c.bf16 %v2861, %v2861
      %v2894 = vpack.c.bf16 %v2862, %v2862
      %v2895 = vpack.c.bf16 %v2863, %v2863
      %v2896 = vpack.c.bf16 %v2864, %v2864
      %v2897 = vld [vmem:[%s3] sm:$0x3]
      %v2898 = vld [vmem:[%s4] sm:$0x1]
      %v2900 = vperm.slane %v2898, 0
      %v2934 = vunpack.c.l.b16 %v2865
      %v2935 = vunpack.c.l.b16 %v2866
      %v2936 = vunpack.c.l.b16 %v2867
      %v2937 = vunpack.c.l.b16 %v2868
      %v2938 = vunpack.c.l.b16 %v2869
      %v2939 = vunpack.c.l.b16 %v2870
      %v2940 = vunpack.c.l.b16 %v2871
      %v2941 = vunpack.c.l.b16 %v2872
      %v2942 = vunpack.c.l.b16 %v2873
      %v2943 = vunpack.c.l.b16 %v2874
      %v2944 = vunpack.c.l.b16 %v2875
      %v2945 = vunpack.c.l.b16 %v2876
      %v2946 = vunpack.c.l.b16 %v2877
      %v2947 = vunpack.c.l.b16 %v2878
      %v2948 = vunpack.c.l.b16 %v2879
      %v2949 = vunpack.c.l.b16 %v2880
      %v2950 = vunpack.c.l.b16 %v2881
      %v2951 = vunpack.c.l.b16 %v2882
      %v2952 = vunpack.c.l.b16 %v2883
      %v2953 = vunpack.c.l.b16 %v2884
      %v2954 = vunpack.c.l.b16 %v2885
      %v2955 = vunpack.c.l.b16 %v2886
      %v2956 = vunpack.c.l.b16 %v2887
      %v2957 = vunpack.c.l.b16 %v2888
      %v2958 = vunpack.c.l.b16 %v2889
      %v2959 = vunpack.c.l.b16 %v2890
      %v2960 = vunpack.c.l.b16 %v2891
      %v2961 = vunpack.c.l.b16 %v2892
      %v2962 = vunpack.c.l.b16 %v2893
      %v2963 = vunpack.c.l.b16 %v2894
      %v2964 = vunpack.c.l.b16 %v2895
      %v2965 = vunpack.c.l.b16 %v2896
      %v2966 = vpack.c.b16 %v2935, %v2934
      %v2967 = vpack.c.b16 %v2937, %v2936
      %v2968 = vpack.c.b16 %v2939, %v2938
      %v2969 = vpack.c.b16 %v2941, %v2940
      %v2970 = vpack.c.b16 %v2943, %v2942
      %v2971 = vpack.c.b16 %v2945, %v2944
      %v2972 = vpack.c.b16 %v2947, %v2946
      %v2973 = vpack.c.b16 %v2949, %v2948
      %v2974 = vpack.c.b16 %v2951, %v2950
      %v2975 = vpack.c.b16 %v2953, %v2952
      %v2976 = vpack.c.b16 %v2955, %v2954
      %v2977 = vpack.c.b16 %v2957, %v2956
      %v2978 = vpack.c.b16 %v2959, %v2958
      %v2979 = vpack.c.b16 %v2961, %v2960
      %v2980 = vpack.c.b16 %v2963, %v2962
      %v2981 = vpack.c.b16 %v2965, %v2964
      %vm2982 = vcmask 31744
      %v2984 = vsel %vm2982, %v2966, 0
      %v2987 = vsel %vm2982, %v2967, 0
      %v2990 = vsel %vm2982, %v2968, 0
      %v2993 = vsel %vm2982, %v2969, 0
      %v2996 = vsel %vm2982, %v2970, 0
      %v2999 = vsel %vm2982, %v2971, 0
      %v3002 = vsel %vm2982, %v2972, 0
      %v3005 = vsel %vm2982, %v2973, 0
      %v3008 = vsel %vm2982, %v2974, 0
      %v3011 = vsel %vm2982, %v2975, 0
      %v3014 = vsel %vm2982, %v2976, 0
      %v3017 = vsel %vm2982, %v2977, 0
      %v3020 = vsel %vm2982, %v2978, 0
      %v3023 = vsel %vm2982, %v2979, 0
      %v3026 = vsel %vm2982, %v2980, 0
      %v3029 = vsel %vm2982, %v2981, 0
      %vm3031 = vcmask 1041408
      %v3033 = vsel %vm3031, %v2897, 0
      %3035 = vmatpush.bf16.msra.mxu0 0
      %3036 = vmatpush.bf16.msra.mxu0 0
      %3037 = vmatpush.bf16.msra.mxu0 0
      %3038 = vmatpush.bf16.msra.mxu0 0
      %3039 = vmatpush.bf16.msra.mxu0 0
      %3040 = vmatpush.bf16.msra.mxu0 0
      %3041 = vmatpush.bf16.msra.mxu0 0
      %3042 = vmatpush.bf16.msra.mxu0 %v3033
      %3043 = vmatmul.bf16.gmra.mxu0 %v2984
      %v3044 = vpop.f32.mrf.mxu0
      %v3045 = vadd.f32 %v2900, %v3044
      %v3046 = vpop.f32.mrf.mxu0
      %v3047 = vadd.f32 %v2900, %v3046
      %3048 = vmatmul.bf16.gmra.mxu0 %v2987
      %v3049 = vpop.f32.mrf.mxu0
      %v3050 = vadd.f32 %v2900, %v3049
      %v3051 = vpop.f32.mrf.mxu0
      %v3052 = vadd.f32 %v2900, %v3051
      %3053 = vmatmul.bf16.gmra.mxu0 %v2990
      %v3054 = vpop.f32.mrf.mxu0
      %v3055 = vadd.f32 %v2900, %v3054
      %v3056 = vpop.f32.mrf.mxu0
      %v3057 = vadd.f32 %v2900, %v3056
      %3058 = vmatmul.bf16.gmra.mxu0 %v2993
      %v3059 = vpop.f32.mrf.mxu0
      %v3060 = vadd.f32 %v2900, %v3059
      %v3061 = vpop.f32.mrf.mxu0
      %v3062 = vadd.f32 %v2900, %v3061
      %3063 = vmatmul.bf16.gmra.mxu0 %v2996
      %v3064 = vpop.f32.mrf.mxu0
      %v3065 = vadd.f32 %v2900, %v3064
      %v3066 = vpop.f32.mrf.mxu0
      %v3067 = vadd.f32 %v2900, %v3066
      %3068 = vmatmul.bf16.gmra.mxu0 %v2999
      %v3069 = vpop.f32.mrf.mxu0
      %v3070 = vadd.f32 %v2900, %v3069
      %v3071 = vpop.f32.mrf.mxu0
      %v3072 = vadd.f32 %v2900, %v3071
      %3073 = vmatmul.bf16.gmra.mxu0 %v3002
      %v3074 = vpop.f32.mrf.mxu0
      %v3075 = vadd.f32 %v2900, %v3074
      %v3076 = vpop.f32.mrf.mxu0
      %v3077 = vadd.f32 %v2900, %v3076
      %3078 = vmatmul.bf16.gmra.mxu0 %v3005
      %v3079 = vpop.f32.mrf.mxu0
      %v3080 = vadd.f32 %v2900, %v3079
      %v3081 = vpop.f32.mrf.mxu0
      %v3082 = vadd.f32 %v2900, %v3081
      %3083 = vmatmul.bf16.gmra.mxu0 %v3008
      %v3084 = vpop.f32.mrf.mxu0
      %v3085 = vadd.f32 %v2900, %v3084
      %v3086 = vpop.f32.mrf.mxu0
      %v3087 = vadd.f32 %v2900, %v3086
      %3088 = vmatmul.bf16.gmra.mxu0 %v3011
      %v3089 = vpop.f32.mrf.mxu0
      %v3090 = vadd.f32 %v2900, %v3089
      %v3091 = vpop.f32.mrf.mxu0
      %v3092 = vadd.f32 %v2900, %v3091
      %3093 = vmatmul.bf16.gmra.mxu0 %v3014
      %v3094 = vpop.f32.mrf.mxu0
      %v3095 = vadd.f32 %v2900, %v3094
      %v3096 = vpop.f32.mrf.mxu0
      %v3097 = vadd.f32 %v2900, %v3096
      %3098 = vmatmul.bf16.gmra.mxu0 %v3017
      %v3099 = vpop.f32.mrf.mxu0
      %v3100 = vadd.f32 %v2900, %v3099
      %v3101 = vpop.f32.mrf.mxu0
      %v3102 = vadd.f32 %v2900, %v3101
      %3103 = vmatmul.bf16.gmra.mxu0 %v3020
      %v3104 = vpop.f32.mrf.mxu0
      %v3105 = vadd.f32 %v2900, %v3104
      %v3106 = vpop.f32.mrf.mxu0
      %v3107 = vadd.f32 %v2900, %v3106
      %3108 = vmatmul.bf16.gmra.mxu0 %v3023
      %v3109 = vpop.f32.mrf.mxu0
      %v3110 = vadd.f32 %v2900, %v3109
      %v3111 = vpop.f32.mrf.mxu0
      %v3112 = vadd.f32 %v2900, %v3111
      %3113 = vmatmul.bf16.gmra.mxu0 %v3026
      %v3114 = vpop.f32.mrf.mxu0
      %v3115 = vadd.f32 %v2900, %v3114
      %v3116 = vpop.f32.mrf.mxu0
      %v3117 = vadd.f32 %v2900, %v3116
      %3118 = vmatmul.bf16.gmra.mxu0 %v3029
      %v3119 = vpop.f32.mrf.mxu0
      %v3120 = vadd.f32 %v2900, %v3119
      %v3121 = vpop.f32.mrf.mxu0
      %v3122 = vadd.f32 %v2900, %v3121
      %3123 = vdwg.mxu0
      %v3124 = vmax.f32 %v3045, 0.0
      %v3125 = vmax.f32 %v3047, 0.0
      %v3126 = vmax.f32 %v3050, 0.0
      %v3127 = vmax.f32 %v3052, 0.0
      %v3128 = vmax.f32 %v3055, 0.0
      %v3129 = vmax.f32 %v3057, 0.0
      %v3130 = vmax.f32 %v3060, 0.0
      %v3131 = vmax.f32 %v3062, 0.0
      %v3132 = vmax.f32 %v3065, 0.0
      %v3133 = vmax.f32 %v3067, 0.0
      %v3134 = vmax.f32 %v3070, 0.0
      %v3135 = vmax.f32 %v3072, 0.0
      %v3136 = vmax.f32 %v3075, 0.0
      %v3137 = vmax.f32 %v3077, 0.0
      %v3138 = vmax.f32 %v3080, 0.0
      %v3139 = vmax.f32 %v3082, 0.0
      %v3140 = vmax.f32 %v3085, 0.0
      %v3141 = vmax.f32 %v3087, 0.0
      %v3142 = vmax.f32 %v3090, 0.0
      %v3143 = vmax.f32 %v3092, 0.0
      %v3144 = vmax.f32 %v3095, 0.0
      %v3145 = vmax.f32 %v3097, 0.0
      %v3146 = vmax.f32 %v3100, 0.0
      %v3147 = vmax.f32 %v3102, 0.0
      %v3148 = vmax.f32 %v3105, 0.0
      %v3149 = vmax.f32 %v3107, 0.0
      %v3150 = vmax.f32 %v3110, 0.0
      %v3151 = vmax.f32 %v3112, 0.0
      %v3152 = vmax.f32 %v3115, 0.0
      %v3153 = vmax.f32 %v3117, 0.0
      %v3154 = vmax.f32 %v3120, 0.0
      %v3155 = vmax.f32 %v3122, 0.0
      %v3156 = vpack.c.bf16 %v3124, %v3124
      %v3157 = vpack.c.bf16 %v3125, %v3125
      %v3158 = vpack.c.bf16 %v3126, %v3126
      %v3159 = vpack.c.bf16 %v3127, %v3127
      %v3160 = vpack.c.bf16 %v3128, %v3128
      %v3161 = vpack.c.bf16 %v3129, %v3129
      %v3162 = vpack.c.bf16 %v3130, %v3130
      %v3163 = vpack.c.bf16 %v3131, %v3131
      %v3164 = vpack.c.bf16 %v3132, %v3132
      %v3165 = vpack.c.bf16 %v3133, %v3133
      %v3166 = vpack.c.bf16 %v3134, %v3134
      %v3167 = vpack.c.bf16 %v3135, %v3135
      %v3168 = vpack.c.bf16 %v3136, %v3136
      %v3169 = vpack.c.bf16 %v3137, %v3137
      %v3170 = vpack.c.bf16 %v3138, %v3138
      %v3171 = vpack.c.bf16 %v3139, %v3139
      %v3172 = vpack.c.bf16 %v3140, %v3140
      %v3173 = vpack.c.bf16 %v3141, %v3141
      %v3174 = vpack.c.bf16 %v3142, %v3142
      %v3175 = vpack.c.bf16 %v3143, %v3143
      %v3176 = vpack.c.bf16 %v3144, %v3144
      %v3177 = vpack.c.bf16 %v3145, %v3145
      %v3178 = vpack.c.bf16 %v3146, %v3146
      %v3179 = vpack.c.bf16 %v3147, %v3147
      %v3180 = vpack.c.bf16 %v3148, %v3148
      %v3181 = vpack.c.bf16 %v3149, %v3149
      %v3182 = vpack.c.bf16 %v3150, %v3150
      %v3183 = vpack.c.bf16 %v3151, %v3151
      %v3184 = vpack.c.bf16 %v3152, %v3152
      %v3185 = vpack.c.bf16 %v3153, %v3153
      %v3186 = vpack.c.bf16 %v3154, %v3154
      %v3187 = vpack.c.bf16 %v3155, %v3155
      %vm3188 = vcmask 60416
      %3189 = vst.msk [vmem:[%s255] sm:$0xf] %vm3188, %v3156
      %3190 = vst.msk [vmem:[%s255 + $0x4] sm:$0xf] %vm3188, %v3157
      %3191 = vst.msk [vmem:[%s255 + $0x8] sm:$0xf] %vm3188, %v3158
      %3192 = vst.msk [vmem:[%s255 + $0xc] sm:$0xf] %vm3188, %v3159
      %3193 = vst.msk [vmem:[%s255 + $0x10] sm:$0xf] %vm3188, %v3160
      %3194 = vst.msk [vmem:[%s255 + $0x14] sm:$0xf] %vm3188, %v3161
      %3195 = vst.msk [vmem:[%s255 + $0x18] sm:$0xf] %vm3188, %v3162
      %3196 = vst.msk [vmem:[%s255 + $0x1c] sm:$0xf] %vm3188, %v3163
      %3197 = vst.msk [vmem:[%s255 + $0x20] sm:$0xf] %vm3188, %v3164
      %3198 = vst.msk [vmem:[%s255 + $0x24] sm:$0xf] %vm3188, %v3165
      %3199 = vst.msk [vmem:[%s255 + $0x28] sm:$0xf] %vm3188, %v3166
      %3200 = vst.msk [vmem:[%s255 + $0x2c] sm:$0xf] %vm3188, %v3167
      %3201 = vst.msk [vmem:[%s255 + $0x30] sm:$0xf] %vm3188, %v3168
      %3202 = vst.msk [vmem:[%s255 + $0x34] sm:$0xf] %vm3188, %v3169
      %3203 = vst.msk [vmem:[%s255 + $0x38] sm:$0xf] %vm3188, %v3170
      %3204 = vst.msk [vmem:[%s255 + $0x3c] sm:$0xf] %vm3188, %v3171
      %3205 = vst.msk [vmem:[%s255 + $0x40] sm:$0xf] %vm3188, %v3172
      %3206 = vst.msk [vmem:[%s255 + $0x44] sm:$0xf] %vm3188, %v3173
      %3207 = vst.msk [vmem:[%s255 + $0x48] sm:$0xf] %vm3188, %v3174
      %3208 = vst.msk [vmem:[%s255 + $0x4c] sm:$0xf] %vm3188, %v3175
      %3209 = vst.msk [vmem:[%s255 + $0x50] sm:$0xf] %vm3188, %v3176
      %3210 = vst.msk [vmem:[%s255 + $0x54] sm:$0xf] %vm3188, %v3177
      %3211 = vst.msk [vmem:[%s255 + $0x58] sm:$0xf] %vm3188, %v3178
      %3212 = vst.msk [vmem:[%s255 + $0x5c] sm:$0xf] %vm3188, %v3179
      %3213 = vst.msk [vmem:[%s255 + $0x60] sm:$0xf] %vm3188, %v3180
      %3214 = vst.msk [vmem:[%s255 + $0x64] sm:$0xf] %vm3188, %v3181
      %3215 = vst.msk [vmem:[%s255 + $0x68] sm:$0xf] %vm3188, %v3182
      %3216 = vst.msk [vmem:[%s255 + $0x6c] sm:$0xf] %vm3188, %v3183
      %3217 = vst.msk [vmem:[%s255 + $0x70] sm:$0xf] %vm3188, %v3184
      %3218 = vst.msk [vmem:[%s255 + $0x74] sm:$0xf] %vm3188, %v3185
      %3219 = vst.msk [vmem:[%s255 + $0x78] sm:$0xf] %vm3188, %v3186
      %3220 = vst.msk [vmem:[%s255 + $0x7c] sm:$0xf] %vm3188, %v3187
      %s3221 = smul.u32 16, %s21
      %p3222 = scmp.lt.s32.totalorder %s20, 1
      %s3223 = scalar_select %p3222, %s20, 1
      %p3224 = scmp.lt.s32.totalorder %s3221, 15
      %s3225 = scalar_select %p3224, %s3221, 15
      %s3226 = smul.addr %s3225, 2
      %s3227 = smul.addr %s3223, 32
      %s3228 = sadd.s32 %s3226, %s3227
      %s3229 = smul.addr %s3228, 4
      %s3230 = scalar_lea.vmem %s5, %s3229
      // Predicated region
      $region41: #{tpu_custom_call.1} parent=39 // pred_check
        %p3231 = pneg %p160
      $region42: #{tpu_custom_call.1} parent=39 // pred_check_branch
        %3233 = sbr.rel (%p3231) target = $region44
      $region43: #{tpu_custom_call.1} parent=39 // pred_region
        %s3234 = smul.u32 16, %s21
      $region44: #{tpu_custom_call.1} parent=39 // pred_fallthru
        _
    $region40: #{tpu_custom_call.1} parent=5 // pred_fallthru
      _
    %p3235 = scmp.le.s32.totalorder 2, %s11
    // Predicated region
    $region45: #{tpu_custom_call.1} parent=5 // pred_check
      %p3236 = pneg %p3235
    $region46: #{tpu_custom_call.1} parent=5 // pred_check_branch
      %3238 = sbr.rel (%p3236) target = $region48
    $region47: #{tpu_custom_call.1} parent=5 // pred_region
      %s3239 = ssub.s32 %s11, 2
      // Predicated region
      $region49: #{tpu_custom_call.1} parent=47 // pred_check
        %p3240 = pneg %p166
      $region50: #{tpu_custom_call.1} parent=47 // pred_check_branch
        %3242 = sbr.rel (%p3240) target = $region52
      $region51: #{tpu_custom_call.1} parent=47 // pred_region
        %s3243 = smul.u32 16, %s23
        %p3244 = scmp.lt.s32.totalorder %s22, 1
        %s3245 = scalar_select %p3244, %s22, 1
        %p3246 = scmp.lt.s32.totalorder %s3243, 15
        %s3247 = scalar_select %p3246, %s3243, 15
        %s3248 = smul.addr %s3247, 2
        %s3249 = smul.addr %s3245, 32
        %s3250 = sadd.s32 %s3248, %s3249
        %s3251 = smul.addr %s3250, 4
        %s3252 = scalar_lea.vmem %s5, %s3251
      $region52: #{tpu_custom_call.1} parent=47 // pred_fallthru
        _
    $region48: #{tpu_custom_call.1} parent=5 // pred_fallthru
      _
  $region6: #{tpu_custom_call.1} parent=0 // loop_footer
    %s15 = sadd.s32 1, %s11
  $region7: #{tpu_custom_call.1} parent=0 // loop_footer_branch
    %10 = sbr.rel target = $region3
  $region8: #{tpu_custom_call.1} parent=0 // loop_exit
    _

</llo_original>
